<compile_context>
chip_gen: v7x
topology: tpu7x:2x2x1
jax: 0.10.0
libtpu: 0.0.40
codegen_flags: <defaults>
</compile_context>

<pallas_src>
import jax
import jax.numpy as jnp
from jax.experimental import pallas as pl
from jax.experimental.pallas import tpu as pltpu


def _round_up(x, m):
    return (x + m - 1) // m * m


# ----------------------------- Pallas kernel ---------------------------------
def _textcnn_kernel(x_ref, pw_ref, pb_ref, dw_ref, db_ref, out_ref):
    """One batch tile.

    x_ref  : (TB, L*Cin)      flattened embeddings
    pw_ref : (L*Cin, C_PAD)   fused conv+avg-pool weight (all convs, zero-padded lanes)
    pb_ref : (1, C_PAD)       fused conv biases
    dw_ref : (C_PAD, OUT_PAD) decoder weight (zero-padded)
    db_ref : (1, OUT_PAD)     decoder bias
    out_ref: (TB, OUT_PAD)    lane-dense logits slab
    """
    x = x_ref[...]
    pooled = jnp.dot(x, pw_ref[...],
                     preferred_element_type=jnp.float32,
                     precision=jax.lax.Precision.HIGHEST) + pb_ref[...]
    enc = jnp.maximum(pooled, 0.0)          # ReLU
    # TODO(synk): dropout(p=0.5) modeled as identity (inference mode).
    out = jnp.dot(enc, dw_ref[...],
                  preferred_element_type=jnp.float32,
                  precision=jax.lax.Precision.HIGHEST) + db_ref[...]
    out_ref[...] = out.astype(out_ref.dtype)


# ------------------------- parameter pre-packing ------------------------------
def prepack_textcnn_params(params, kernel_sizes, seq_len):
    """Fold conv + global-avg-pool into one dense weight; pad everything lane-dense."""
    # Single embedding table: concat trainable + constant embeddings -> (vocab, 2E).
    table = jnp.concatenate([params["emb"], params["const_emb"]], axis=-1)
    table = table.astype(jnp.float32)
    cin = table.shape[-1]
    L = seq_len

    v_blocks, biases = [], []
    for i, k in enumerate(kernel_sizes):
        w = params["conv_w"][i]                       # (k, Cin, Cout_i)
        cout = w.shape[-1]
        lout = L - k + 1
        v = jnp.zeros((L, cin, cout), jnp.float32)
        for j in range(k):                            # fold avg-pool into the taps
            v = v.at[j:j + lout].add(w[j] / lout)
        v_blocks.append(v.reshape(L * cin, cout))
        biases.append(params["conv_b"][i].reshape(1, cout))

    pool_w = jnp.concatenate(v_blocks, axis=1)        # (L*Cin, sumC)
    pool_b = jnp.concatenate(biases, axis=1)          # (1, sumC)
    sum_c = pool_w.shape[1]
    c_pad = _round_up(max(sum_c, 128), 128)
    pool_w = jnp.pad(pool_w, ((0, 0), (0, c_pad - sum_c)))
    pool_b = jnp.pad(pool_b, ((0, 0), (0, c_pad - sum_c)))

    n_cls = params["dec_w"].shape[1]
    out_pad = _round_up(max(n_cls, 128), 128)
    dec_w = jnp.pad(params["dec_w"].astype(jnp.float32),
                    ((0, c_pad - sum_c), (0, out_pad - n_cls)))
    dec_b = jnp.pad(params["dec_b"].reshape(1, -1).astype(jnp.float32),
                    ((0, 0), (0, out_pad - n_cls)))

    return {"table": table, "pool_w": pool_w, "pool_b": pool_b,
            "dec_w": dec_w, "dec_b": dec_b,
            "num_classes": n_cls, "seq_len": L}


# ------------------------------- wrapper --------------------------------------
def textcnn_forward(tokens, packed):
    """tokens: (B, L) int32 ids. Returns (B, num_classes) logits."""
    B, L = tokens.shape
    assert L == packed["seq_len"]
    table = packed["table"]
    cin = table.shape[-1]

    # Single gather, then a free contiguous reshape to (B, L*Cin) in the wrapper
    # (avoids any in-kernel relayout).
    emb = jnp.take(table, tokens, axis=0)             # (B, L, Cin)
    x = emb.reshape(B, L * cin).astype(jnp.float32)

    # Batch tile: sublane-aligned, capped so VMEM stays tiny on v7x (64 MiB budget).
    tb = 256 if B >= 256 else _round_up(B, 8)
    b_pad = _round_up(B, tb)
    if b_pad != B:
        x = jnp.pad(x, ((0, b_pad - B), (0, 0)))

    LC = L * cin
    C_PAD = packed["pool_w"].shape[1]
    OUT_PAD = packed["dec_w"].shape[1]

    out = pl.pallas_call(
        _textcnn_kernel,
        out_shape=jax.ShapeDtypeStruct((b_pad, OUT_PAD), jnp.float32),
        grid=(b_pad // tb,),
        in_specs=[
            pl.BlockSpec((tb, LC), lambda i: (i, 0)),        # x (batch-tiled)
            pl.BlockSpec((LC, C_PAD), lambda i: (0, 0)),     # fused conv+pool weight
            pl.BlockSpec((1, C_PAD), lambda i: (0, 0)),      # fused conv bias
            pl.BlockSpec((C_PAD, OUT_PAD), lambda i: (0, 0)),  # decoder weight
            pl.BlockSpec((1, OUT_PAD), lambda i: (0, 0)),    # decoder bias
        ],
        out_specs=pl.BlockSpec((tb, OUT_PAD), lambda i: (i, 0)),
        compiler_params=pltpu.CompilerParams(
            dimension_semantics=("parallel",),
            vmem_limit_bytes=32 * 1024 * 1024),
    )(x, packed["pool_w"], packed["pool_b"], packed["dec_w"], packed["dec_b"])

    return out[:B, :packed["num_classes"]]


# --------------------------- pure-JAX reference --------------------------------
def textcnn_reference(tokens, params, kernel_sizes):
    e1 = jnp.take(params["emb"], tokens, axis=0)
    e2 = jnp.take(params["const_emb"], tokens, axis=0)
    emb = jnp.concatenate([e1, e2], axis=-1).astype(jnp.float32)  # (B, L, 2E)
    B, L, Cin = emb.shape
    feats = []
    for i, k in enumerate(kernel_sizes):
        w = params["conv_w"][i]          # (k, Cin, Cout)
        b = params["conv_b"][i]          # (1, Cout)
        Lout = L - k + 1
        acc = jnp.zeros((B, Lout, w.shape[-1]), jnp.float32)
        for j in range(k):
            acc = acc + jnp.einsum("blc,co->blo", emb[:, j:j + Lout, :], w[j],
                                   precision=jax.lax.Precision.HIGHEST)
        acc = acc + b[None]
        feats.append(jnp.maximum(acc.mean(axis=1), 0.0))
    enc = jnp.concatenate(feats, axis=1)
    return jnp.dot(enc, params["dec_w"],
                   precision=jax.lax.Precision.HIGHEST) + params["dec_b"]


# --------------------------------- main ----------------------------------------
if __name__ == "__main__":
    vocab_size = 50
    embed_size = 16
    kernel_sizes = (3, 4, 5)
    num_channels = (8, 8, 8)
    B, L = 2, 16

    key = jax.random.PRNGKey(0)
    keys = jax.random.split(key, 4 + 2 * len(kernel_sizes))

    params = {
        "emb": 0.1 * jax.random.normal(keys[0], (vocab_size, embed_size), jnp.float32),
        "const_emb": 0.1 * jax.random.normal(keys[1], (vocab_size, embed_size), jnp.float32),
        # decoder: PyTorch Linear(sum(C), 2); stored pre-transposed as (sumC, 2)
        "dec_w": 0.1 * jax.random.normal(keys[2], (sum(num_channels), 2), jnp.float32),
        "dec_b": 0.1 * jax.random.normal(keys[3], (1, 2), jnp.float32),
        "conv_w": [],
        "conv_b": [],
    }
    cin = 2 * embed_size
    for i, (c, k) in enumerate(zip(num_channels, kernel_sizes)):
        # PyTorch Conv1d weight is (Cout, Cin, k); stored pre-transposed as (k, Cin, Cout).
        params["conv_w"].append(
            0.1 * jax.random.normal(keys[4 + 2 * i], (k, cin, c), jnp.float32))
        params["conv_b"].append(
            0.1 * jax.random.normal(keys[5 + 2 * i], (1, c), jnp.float32))

    tokens = jax.random.randint(key, (B, L), 0, vocab_size, dtype=jnp.int32)

    packed = prepack_textcnn_params(params, kernel_sizes, L)
    out = textcnn_forward(tokens, packed)
    out = jax.block_until_ready(out)

    ref = textcnn_reference(tokens, params, kernel_sizes)
    assert out.shape == (B, 2), out.shape
    assert jnp.allclose(out, ref, atol=1e-4, rtol=1e-4), (out, ref)

    print("KERNEL_OK")
</pallas_src>

<mosaic_0001>
module attributes {stable_mosaic.version = 11 : i64} {
  func.func @_textcnn_kernel(%arg0: i32, %arg1: memref<8x512xf32, #tpu.memory_space<vmem>>, %arg2: memref<512x128xf32, #tpu.memory_space<vmem>>, %arg3: memref<1x128xf32, #tpu.memory_space<vmem>>, %arg4: memref<128x128xf32, #tpu.memory_space<vmem>>, %arg5: memref<1x128xf32, #tpu.memory_space<vmem>>, %arg6: memref<8x128xf32, #tpu.memory_space<vmem>>) attributes {dimension_semantics = [#tpu.dimension_semantics<parallel>], iteration_bounds = array<i64: 1>, scalar_prefetch = 0 : i64, scratch_operands = 0 : i64, tpu.core_type = #tpu.core_type<tc>, window_params = [{transform_indices = @transform_0, window_bounds = array<i64: 8, 512>}, {pipeline_mode = #tpu.pipeline_mode<synchronous>, transform_indices = @transform_1, window_bounds = array<i64: 512, 128>}, {pipeline_mode = #tpu.pipeline_mode<synchronous>, transform_indices = @transform_2, window_bounds = array<i64: 1, 128>}, {pipeline_mode = #tpu.pipeline_mode<synchronous>, transform_indices = @transform_3, window_bounds = array<i64: 128, 128>}, {pipeline_mode = #tpu.pipeline_mode<synchronous>, transform_indices = @transform_4, window_bounds = array<i64: 1, 128>}, {transform_indices = @transform_5, window_bounds = array<i64: 8, 128>}]} {
    %c0 = arith.constant 0 : index
    %c0_0 = arith.constant 0 : index
    %0 = vector.load %arg1[%c0, %c0_0] : memref<8x512xf32, #tpu.memory_space<vmem>>, vector<8x512xf32>
    %c0_1 = arith.constant 0 : index
    %c0_2 = arith.constant 0 : index
    %1 = vector.load %arg2[%c0_1, %c0_2] : memref<512x128xf32, #tpu.memory_space<vmem>>, vector<512x128xf32>
    %cst = arith.constant dense<0.000000e+00> : vector<8x128xf32>
    %2 = tpu.matmul %0, %1, %cst {dimension_numbers = #tpu.dot_dimension_numbers<[1], [0], [0], [1], [0, 0, 1, 1], [], []>, precision = #tpu.contract_precision<fp32>} : vector<8x512xf32>, vector<512x128xf32>, vector<8x128xf32> -> vector<8x128xf32>
    %c0_3 = arith.constant 0 : index
    %c0_4 = arith.constant 0 : index
    %3 = vector.load %arg3[%c0_3, %c0_4] : memref<1x128xf32, #tpu.memory_space<vmem>>, vector<1x128xf32>
    %4 = vector.broadcast %3 : vector<1x128xf32> to vector<8x128xf32>
    %5 = arith.addf %2, %4 : vector<8x128xf32>
    %cst_5 = arith.constant 0.000000e+00 : f32
    %6 = vector.broadcast %cst_5 : f32 to vector<8x128xf32>
    %7 = arith.maximumf %5, %6 : vector<8x128xf32>
    %c0_6 = arith.constant 0 : index
    %c0_7 = arith.constant 0 : index
    %8 = vector.load %arg4[%c0_6, %c0_7] : memref<128x128xf32, #tpu.memory_space<vmem>>, vector<128x128xf32>
    %cst_8 = arith.constant dense<0.000000e+00> : vector<8x128xf32>
    %9 = tpu.matmul %7, %8, %cst_8 {dimension_numbers = #tpu.dot_dimension_numbers<[1], [0], [0], [1], [0, 0, 1, 1], [], []>, precision = #tpu.contract_precision<fp32>} : vector<8x128xf32>, vector<128x128xf32>, vector<8x128xf32> -> vector<8x128xf32>
    %c0_9 = arith.constant 0 : index
    %c0_10 = arith.constant 0 : index
    %10 = vector.load %arg5[%c0_9, %c0_10] : memref<1x128xf32, #tpu.memory_space<vmem>>, vector<1x128xf32>
    %11 = vector.broadcast %10 : vector<1x128xf32> to vector<8x128xf32>
    %12 = arith.addf %9, %11 : vector<8x128xf32>
    %c0_11 = arith.constant 0 : index
    %c0_12 = arith.constant 0 : index
    %13 = vector.load %arg6[%c0_11, %c0_12] : memref<8x128xf32, #tpu.memory_space<vmem>>, vector<8x128xf32>
    tpu.vector_store %arg6[%c0_11, %c0_12], %12 {strides = array<i32>} : memref<8x128xf32, #tpu.memory_space<vmem>>, vector<8x128xf32>,
    return
  }
  func.func @transform_0(%arg0: i32) -> (i32, i32) {
    %c0_i32 = arith.constant 0 : i32
    %c0_i32_0 = arith.constant 0 : i32
    return %arg0, %c0_i32 : i32, i32
  }
  func.func @transform_1(%arg0: i32) -> (i32, i32) {
    %c0_i32 = arith.constant 0 : i32
    %c0_i32_0 = arith.constant 0 : i32
    %c0_i32_1 = arith.constant 0 : i32
    return %c0_i32, %c0_i32_0 : i32, i32
  }
  func.func @transform_2(%arg0: i32) -> (i32, i32) {
    %c0_i32 = arith.constant 0 : i32
    %c0_i32_0 = arith.constant 0 : i32
    %c0_i32_1 = arith.constant 0 : i32
    return %c0_i32, %c0_i32_0 : i32, i32
  }
  func.func @transform_3(%arg0: i32) -> (i32, i32) {
    %c0_i32 = arith.constant 0 : i32
    %c0_i32_0 = arith.constant 0 : i32
    %c0_i32_1 = arith.constant 0 : i32
    return %c0_i32, %c0_i32_0 : i32, i32
  }
  func.func @transform_4(%arg0: i32) -> (i32, i32) {
    %c0_i32 = arith.constant 0 : i32
    %c0_i32_0 = arith.constant 0 : i32
    %c0_i32_1 = arith.constant 0 : i32
    return %c0_i32, %c0_i32_0 : i32, i32
  }
  func.func @transform_5(%arg0: i32) -> (i32, i32) {
    %c0_i32 = arith.constant 0 : i32
    %c0_i32_0 = arith.constant 0 : i32
    return %arg0, %c0_i32 : i32, i32
  }
}

</mosaic_0001>

<llo_original>
// kernel: tpu_custom_call.1
$region0: #{tpu_custom_call.1}
  #allocation0 [shape = 'u32[]', space=smem, size = 0x4, offset = 0x4, fixed_abs, tag = 'smem constant byte address 0x4 - core index']
  #allocation1 [shape = 'u32[144,128]{1,0:T(1,128)}', space=vmem, size = 0x12000, scoped, tag = 'internal scratch']
  %s0 = inlined_call_operand.hbm [shape: f32[8,512], index: 0, kind: input, shape index: {}]
  %s1 = inlined_call_operand.hbm [shape: f32[512,128], index: 1, kind: input, shape index: {}]
  %s2 = inlined_call_operand.vmem [shape: f32[1,128], index: 2, kind: input, shape index: {}]
  %s3 = inlined_call_operand.hbm [shape: f32[128,128], index: 3, kind: input, shape index: {}]
  %s4 = inlined_call_operand.vmem [shape: f32[1,128], index: 4, kind: input, shape index: {}]
  %s5 = inlined_call_operand.hbm [shape: f32[8,128], index: 5, kind: output, shape index: {}]
  %s6 = sld [smem:[#allocation0]]
  $region42: #{tpu_custom_call.1} parent=0
    _
  %s8 = ssub.s32 1, %s6
  %s9 = scalar_select 0, %s8, %s6
  $region1: #{tpu_custom_call.1} parent=0
    #allocation2 [shape = 'u8[16384]{0}', space=vmem, size = 0x4000, scoped, tag = 'input window, operand 0, single buffered']
    #allocation3 [shape = 's32[1]{0}', space=sflag, size = 0x4, scoped, tag = 'scoped memory for tpu_custom_call.1']
    #allocation4 [shape = 's32[1]{0}', space=sflag, size = 0x4, scoped, tag = 'scoped memory for tpu_custom_call.1']
    #allocation5 [shape = 'u8[262144]{0}', space=vmem, size = 0x40000, scoped, tag = 'input window, operand 1, single buffered']
    #allocation6 [shape = 's32[1]{0}', space=sflag, size = 0x4, scoped, tag = 'scoped memory for tpu_custom_call.1']
    #allocation7 [shape = 'u8[65536]{0}', space=vmem, size = 0x10000, scoped, tag = 'input window, operand 3, single buffered']
    #allocation8 [shape = 'u8[4096]{0}', space=vmem, size = 0x1000, scoped, tag = 'output window, operand 0, single buffered']
    %10 = vsyncpa [#allocation3], 0
    %11 = vsyncpa [#allocation6], 0
    %12 = vsyncpa [#allocation4], 0
    // Predicated region
    $region2: #{tpu_custom_call.1} parent=1 // pred_check
      _
    $region3: #{tpu_custom_call.1} parent=1 // pred_check_branch
      %14 = sbr.rel (0) target = $region5
    $region4: #{tpu_custom_call.1} parent=1 // pred_region
      %s16 = ssub.s32 512, 512
      %17 = vsyncadd [#allocation3], %s16
      %s19 = sshll.u32 [#allocation2], 4
      %s20 = int_to_ptr.vmem [resolvable:$true] %s19
      %22 = dma.hbm_to_vmem [thread:$0]  %s0, 512, %s20, [#allocation3]
    $region5: #{tpu_custom_call.1} parent=1 // pred_fallthru
      _
    // Predicated region
    $region6: #{tpu_custom_call.1} parent=1 // pred_check
      _
    $region7: #{tpu_custom_call.1} parent=1 // pred_check_branch
      %24 = sbr.rel (0) target = $region9
    $region8: #{tpu_custom_call.1} parent=1 // pred_region
      %s26 = ssub.s32 8192, 8192
      %27 = vsyncadd [#allocation6], %s26
      %s28 = sshll.u32 [#allocation5], 4
      %s29 = int_to_ptr.vmem [resolvable:$true] %s28
      %34 = dma.hbm_to_vmem [thread:$0]  %s1, 8192, %s29, [#allocation6], 128, 128, 8
    $region9: #{tpu_custom_call.1} parent=1 // pred_fallthru
      _
    // Predicated region
    $region10: #{tpu_custom_call.1} parent=1 // pred_check
      _
    $region11: #{tpu_custom_call.1} parent=1 // pred_check_branch
      %36 = sbr.rel (0) target = $region13
    $region12: #{tpu_custom_call.1} parent=1 // pred_region
      _
    $region13: #{tpu_custom_call.1} parent=1 // pred_fallthru
      _
    // Predicated region
    $region14: #{tpu_custom_call.1} parent=1 // pred_check
      _
    $region15: #{tpu_custom_call.1} parent=1 // pred_check_branch
      %38 = sbr.rel (0) target = $region17
    $region16: #{tpu_custom_call.1} parent=1 // pred_region
      %s40 = ssub.s32 2048, 2048
      %41 = vsyncadd [#allocation6], %s40
      %s42 = sshll.u32 [#allocation7], 4
      %s43 = int_to_ptr.vmem [resolvable:$true] %s42
      %48 = dma.hbm_to_vmem [thread:$0]  %s3, 2048, %s43, [#allocation6], 128, 128, 8
    $region17: #{tpu_custom_call.1} parent=1 // pred_fallthru
      _
    // Predicated region
    $region18: #{tpu_custom_call.1} parent=1 // pred_check
      _
    $region19: #{tpu_custom_call.1} parent=1 // pred_check_branch
      %50 = sbr.rel (0) target = $region21
    $region20: #{tpu_custom_call.1} parent=1 // pred_region
      _
    $region21: #{tpu_custom_call.1} parent=1 // pred_fallthru
      _
    // Predicated region
    $region22: #{tpu_custom_call.1} parent=1 // pred_check
      _
    $region23: #{tpu_custom_call.1} parent=1 // pred_check_branch
      %52 = sbr.rel (0) target = $region25
    $region24: #{tpu_custom_call.1} parent=1 // pred_region
      %53 = dma.done [#allocation3], 512
    $region25: #{tpu_custom_call.1} parent=1 // pred_fallthru
      _
    // Predicated region
    $region26: #{tpu_custom_call.1} parent=1 // pred_check
      _
    $region27: #{tpu_custom_call.1} parent=1 // pred_check_branch
      %55 = sbr.rel (0) target = $region29
    $region28: #{tpu_custom_call.1} parent=1 // pred_region
      %56 = dma.done [#allocation6], 8192
    $region29: #{tpu_custom_call.1} parent=1 // pred_fallthru
      _
    // Predicated region
    $region30: #{tpu_custom_call.1} parent=1 // pred_check
      _
    $region31: #{tpu_custom_call.1} parent=1 // pred_check_branch
      %58 = sbr.rel (0) target = $region33
    $region32: #{tpu_custom_call.1} parent=1 // pred_region
      %59 = dma.done [#allocation6], 2048
    $region33: #{tpu_custom_call.1} parent=1 // pred_fallthru
      _
    %v60 = vld [vmem:[#allocation2] sm:$0xff]
    %v61 = vld [vmem:[#allocation2 + $0x8] sm:$0xff]
    %v62 = vld [vmem:[#allocation2 + $0x10] sm:$0xff]
    %v63 = vld [vmem:[#allocation2 + $0x18] sm:$0xff]
    %v64 = vld [vmem:[#allocation5] sm:$0xff]
    %v65 = vld [vmem:[#allocation5 + $0x8] sm:$0xff]
    %v66 = vld [vmem:[#allocation5 + $0x10] sm:$0xff]
    %v67 = vld [vmem:[#allocation5 + $0x18] sm:$0xff]
    %v68 = vld [vmem:[#allocation5 + $0x20] sm:$0xff]
    %v69 = vld [vmem:[#allocation5 + $0x28] sm:$0xff]
    %v70 = vld [vmem:[#allocation5 + $0x30] sm:$0xff]
    %v71 = vld [vmem:[#allocation5 + $0x38] sm:$0xff]
    %v72 = vld [vmem:[#allocation5 + $0x40] sm:$0xff]
    %v73 = vld [vmem:[#allocation5 + $0x48] sm:$0xff]
    %v74 = vld [vmem:[#allocation5 + $0x50] sm:$0xff]
    %v75 = vld [vmem:[#allocation5 + $0x58] sm:$0xff]
    %v76 = vld [vmem:[#allocation5 + $0x60] sm:$0xff]
    %v77 = vld [vmem:[#allocation5 + $0x68] sm:$0xff]
    %v78 = vld [vmem:[#allocation5 + $0x70] sm:$0xff]
    %v79 = vld [vmem:[#allocation5 + $0x78] sm:$0xff]
    %v80 = vld [vmem:[#allocation5 + $0x80] sm:$0xff]
    %v81 = vld [vmem:[#allocation5 + $0x88] sm:$0xff]
    %v82 = vld [vmem:[#allocation5 + $0x90] sm:$0xff]
    %v83 = vld [vmem:[#allocation5 + $0x98] sm:$0xff]
    %v84 = vld [vmem:[#allocation5 + $0xa0] sm:$0xff]
    %v85 = vld [vmem:[#allocation5 + $0xa8] sm:$0xff]
    %v86 = vld [vmem:[#allocation5 + $0xb0] sm:$0xff]
    %v87 = vld [vmem:[#allocation5 + $0xb8] sm:$0xff]
    %v88 = vld [vmem:[#allocation5 + $0xc0] sm:$0xff]
    %v89 = vld [vmem:[#allocation5 + $0xc8] sm:$0xff]
    %v90 = vld [vmem:[#allocation5 + $0xd0] sm:$0xff]
    %v91 = vld [vmem:[#allocation5 + $0xd8] sm:$0xff]
    %v92 = vld [vmem:[#allocation5 + $0xe0] sm:$0xff]
    %v93 = vld [vmem:[#allocation5 + $0xe8] sm:$0xff]
    %v94 = vld [vmem:[#allocation5 + $0xf0] sm:$0xff]
    %v95 = vld [vmem:[#allocation5 + $0xf8] sm:$0xff]
    %v96 = vld [vmem:[#allocation5 + $0x100] sm:$0xff]
    %v97 = vld [vmem:[#allocation5 + $0x108] sm:$0xff]
    %v98 = vld [vmem:[#allocation5 + $0x110] sm:$0xff]
    %v99 = vld [vmem:[#allocation5 + $0x118] sm:$0xff]
    %v100 = vld [vmem:[#allocation5 + $0x120] sm:$0xff]
    %v101 = vld [vmem:[#allocation5 + $0x128] sm:$0xff]
    %v102 = vld [vmem:[#allocation5 + $0x130] sm:$0xff]
    %v103 = vld [vmem:[#allocation5 + $0x138] sm:$0xff]
    %v104 = vld [vmem:[#allocation5 + $0x140] sm:$0xff]
    %v105 = vld [vmem:[#allocation5 + $0x148] sm:$0xff]
    %v106 = vld [vmem:[#allocation5 + $0x150] sm:$0xff]
    %v107 = vld [vmem:[#allocation5 + $0x158] sm:$0xff]
    %v108 = vld [vmem:[#allocation5 + $0x160] sm:$0xff]
    %v109 = vld [vmem:[#allocation5 + $0x168] sm:$0xff]
    %v110 = vld [vmem:[#allocation5 + $0x170] sm:$0xff]
    %v111 = vld [vmem:[#allocation5 + $0x178] sm:$0xff]
    %v112 = vld [vmem:[#allocation5 + $0x180] sm:$0xff]
    %v113 = vld [vmem:[#allocation5 + $0x188] sm:$0xff]
    %v114 = vld [vmem:[#allocation5 + $0x190] sm:$0xff]
    %v115 = vld [vmem:[#allocation5 + $0x198] sm:$0xff]
    %v116 = vld [vmem:[#allocation5 + $0x1a0] sm:$0xff]
    %v117 = vld [vmem:[#allocation5 + $0x1a8] sm:$0xff]
    %v118 = vld [vmem:[#allocation5 + $0x1b0] sm:$0xff]
    %v119 = vld [vmem:[#allocation5 + $0x1b8] sm:$0xff]
    %v120 = vld [vmem:[#allocation5 + $0x1c0] sm:$0xff]
    %v121 = vld [vmem:[#allocation5 + $0x1c8] sm:$0xff]
    %v122 = vld [vmem:[#allocation5 + $0x1d0] sm:$0xff]
    %v123 = vld [vmem:[#allocation5 + $0x1d8] sm:$0xff]
    %v124 = vld [vmem:[#allocation5 + $0x1e0] sm:$0xff]
    %v125 = vld [vmem:[#allocation5 + $0x1e8] sm:$0xff]
    %v126 = vld [vmem:[#allocation5 + $0x1f0] sm:$0xff]
    %v127 = vld [vmem:[#allocation5 + $0x1f8] sm:$0xff]
    %v128 = vld [vmem:[%s2] sm:$0x1]
    %v130 = vlaneseq
    %v131 = vshrl.u32 %v130, 7
    %v132 = vsub.s32 0, %v131
    %v133 = vrot.slane %v128, %v132
    %135 = vmatprep.subr.mxu0 0.0
    %v136 = vand.u32 %v64, 4294901760
    %137 = vmatpush1.msra.mxu0 %v136
    %138 = vmatprep.subr.mxu0 0.0
    %v139 = vand.u32 %v65, 4294901760
    %140 = vmatpush1.msra.mxu0 %v139
    %141 = vmatprep.subr.mxu0 0.0
    %v142 = vand.u32 %v66, 4294901760
    %143 = vmatpush1.msra.mxu0 %v142
    %144 = vmatprep.subr.mxu0 0.0
    %v145 = vand.u32 %v67, 4294901760
    %146 = vmatpush1.msra.mxu0 %v145
    %147 = vmatprep.subr.mxu0 0.0
    %v148 = vand.u32 %v68, 4294901760
    %149 = vmatpush1.msra.mxu0 %v148
    %150 = vmatprep.subr.mxu0 0.0
    %v151 = vand.u32 %v69, 4294901760
    %152 = vmatpush1.msra.mxu0 %v151
    %153 = vmatprep.subr.mxu0 0.0
    %v154 = vand.u32 %v70, 4294901760
    %155 = vmatpush1.msra.mxu0 %v154
    %156 = vmatprep.subr.mxu0 0.0
    %v157 = vand.u32 %v71, 4294901760
    %158 = vmatpush1.msra.mxu0 %v157
    %159 = vmatprep.subr.mxu0 0.0
    %v160 = vand.u32 %v72, 4294901760
    %161 = vmatpush1.msra.mxu0 %v160
    %162 = vmatprep.subr.mxu0 0.0
    %v163 = vand.u32 %v73, 4294901760
    %164 = vmatpush1.msra.mxu0 %v163
    %165 = vmatprep.subr.mxu0 0.0
    %v166 = vand.u32 %v74, 4294901760
    %167 = vmatpush1.msra.mxu0 %v166
    %168 = vmatprep.subr.mxu0 0.0
    %v169 = vand.u32 %v75, 4294901760
    %170 = vmatpush1.msra.mxu0 %v169
    %171 = vmatprep.subr.mxu0 0.0
    %v172 = vand.u32 %v76, 4294901760
    %173 = vmatpush1.msra.mxu0 %v172
    %174 = vmatprep.subr.mxu0 0.0
    %v175 = vand.u32 %v77, 4294901760
    %176 = vmatpush1.msra.mxu0 %v175
    %177 = vmatprep.subr.mxu0 0.0
    %v178 = vand.u32 %v78, 4294901760
    %179 = vmatpush1.msra.mxu0 %v178
    %180 = vmatprep.subr.mxu0 0.0
    %v181 = vand.u32 %v79, 4294901760
    %182 = vmatpush1.msra.mxu0 %v181
    %183 = vmatprep.subr.mxu0 0.0
    %v184 = vand.u32 %v80, 4294901760
    %185 = vmatpush1.msra.mxu0 %v184
    %186 = vmatprep.subr.mxu0 0.0
    %v187 = vand.u32 %v81, 4294901760
    %188 = vmatpush1.msra.mxu0 %v187
    %189 = vmatprep.subr.mxu0 0.0
    %v190 = vand.u32 %v82, 4294901760
    %191 = vmatpush1.msra.mxu0 %v190
    %192 = vmatprep.subr.mxu0 0.0
    %v193 = vand.u32 %v83, 4294901760
    %194 = vmatpush1.msra.mxu0 %v193
    %195 = vmatprep.subr.mxu0 0.0
    %v196 = vand.u32 %v84, 4294901760
    %197 = vmatpush1.msra.mxu0 %v196
    %198 = vmatprep.subr.mxu0 0.0
    %v199 = vand.u32 %v85, 4294901760
    %200 = vmatpush1.msra.mxu0 %v199
    %201 = vmatprep.subr.mxu0 0.0
    %v202 = vand.u32 %v86, 4294901760
    %203 = vmatpush1.msra.mxu0 %v202
    %204 = vmatprep.subr.mxu0 0.0
    %v205 = vand.u32 %v87, 4294901760
    %206 = vmatpush1.msra.mxu0 %v205
    %207 = vmatprep.subr.mxu0 0.0
    %v208 = vand.u32 %v88, 4294901760
    %209 = vmatpush1.msra.mxu0 %v208
    %210 = vmatprep.subr.mxu0 0.0
    %v211 = vand.u32 %v89, 4294901760
    %212 = vmatpush1.msra.mxu0 %v211
    %213 = vmatprep.subr.mxu0 0.0
    %v214 = vand.u32 %v90, 4294901760
    %215 = vmatpush1.msra.mxu0 %v214
    %216 = vmatprep.subr.mxu0 0.0
    %v217 = vand.u32 %v91, 4294901760
    %218 = vmatpush1.msra.mxu0 %v217
    %219 = vmatprep.subr.mxu0 0.0
    %v220 = vand.u32 %v92, 4294901760
    %221 = vmatpush1.msra.mxu0 %v220
    %222 = vmatprep.subr.mxu0 0.0
    %v223 = vand.u32 %v93, 4294901760
    %224 = vmatpush1.msra.mxu0 %v223
    %225 = vmatprep.subr.mxu0 0.0
    %v226 = vand.u32 %v94, 4294901760
    %227 = vmatpush1.msra.mxu0 %v226
    %228 = vmatprep.subr.mxu0 0.0
    %v229 = vand.u32 %v95, 4294901760
    %230 = vmatpush1.msra.mxu0 %v229
    %v231 = vand.u32 %v61, 4294901760
    %v232 = vsub.f32 %v61, %v231
    %v233 = vand.u32 %v232, 4294901760
    %v234 = vsub.f32 %v232, %v233
    %v235 = vand.u32 %v234, 4294901760
    %236 = vmatprep.mubr.f32.mxu0 %v235
    %v237 = vand.u32 %v60, 4294901760
    %v238 = vsub.f32 %v60, %v237
    %v239 = vand.u32 %v238, 4294901760
    %v240 = vsub.f32 %v238, %v239
    %v241 = vand.u32 %v240, 4294901760
    %242 = vmatmul.mubr.f32.gmra.mrb[0].mxu0 %v241
    %v243 = vpop.f32.mrb[0].mxu0
    %v244 = vadd.f32 %v133, %v243
    %v245 = vpop.f32.mrb[0].mxu0
    %246 = vdwg.mxu0
    %247 = vmatprep.subr.mxu0 0.0
    %v248 = vand.u32 %v64, 4294901760
    %v249 = vsub.f32 %v64, %v248
    %v250 = vand.u32 %v249, 4294901760
    %v251 = vsub.f32 %v249, %v250
    %v252 = vand.u32 %v251, 4294901760
    %253 = vmatpush1.msra.mxu0 %v252
    %254 = vmatprep.subr.mxu0 0.0
    %v255 = vand.u32 %v65, 4294901760
    %v256 = vsub.f32 %v65, %v255
    %v257 = vand.u32 %v256, 4294901760
    %v258 = vsub.f32 %v256, %v257
    %v259 = vand.u32 %v258, 4294901760
    %260 = vmatpush1.msra.mxu0 %v259
    %261 = vmatprep.subr.mxu0 0.0
    %v262 = vand.u32 %v66, 4294901760
    %v263 = vsub.f32 %v66, %v262
    %v264 = vand.u32 %v263, 4294901760
    %v265 = vsub.f32 %v263, %v264
    %v266 = vand.u32 %v265, 4294901760
    %267 = vmatpush1.msra.mxu0 %v266
    %268 = vmatprep.subr.mxu0 0.0
    %v269 = vand.u32 %v67, 4294901760
    %v270 = vsub.f32 %v67, %v269
    %v271 = vand.u32 %v270, 4294901760
    %v272 = vsub.f32 %v270, %v271
    %v273 = vand.u32 %v272, 4294901760
    %274 = vmatpush1.msra.mxu0 %v273
    %275 = vmatprep.subr.mxu0 0.0
    %v276 = vand.u32 %v68, 4294901760
    %v277 = vsub.f32 %v68, %v276
    %v278 = vand.u32 %v277, 4294901760
    %v279 = vsub.f32 %v277, %v278
    %v280 = vand.u32 %v279, 4294901760
    %281 = vmatpush1.msra.mxu0 %v280
    %282 = vmatprep.subr.mxu0 0.0
    %v283 = vand.u32 %v69, 4294901760
    %v284 = vsub.f32 %v69, %v283
    %v285 = vand.u32 %v284, 4294901760
    %v286 = vsub.f32 %v284, %v285
    %v287 = vand.u32 %v286, 4294901760
    %288 = vmatpush1.msra.mxu0 %v287
    %289 = vmatprep.subr.mxu0 0.0
    %v290 = vand.u32 %v70, 4294901760
    %v291 = vsub.f32 %v70, %v290
    %v292 = vand.u32 %v291, 4294901760
    %v293 = vsub.f32 %v291, %v292
    %v294 = vand.u32 %v293, 4294901760
    %295 = vmatpush1.msra.mxu0 %v294
    %296 = vmatprep.subr.mxu0 0.0
    %v297 = vand.u32 %v71, 4294901760
    %v298 = vsub.f32 %v71, %v297
    %v299 = vand.u32 %v298, 4294901760
    %v300 = vsub.f32 %v298, %v299
    %v301 = vand.u32 %v300, 4294901760
    %302 = vmatpush1.msra.mxu0 %v301
    %303 = vmatprep.subr.mxu0 0.0
    %v304 = vand.u32 %v72, 4294901760
    %v305 = vsub.f32 %v72, %v304
    %v306 = vand.u32 %v305, 4294901760
    %v307 = vsub.f32 %v305, %v306
    %v308 = vand.u32 %v307, 4294901760
    %309 = vmatpush1.msra.mxu0 %v308
    %310 = vmatprep.subr.mxu0 0.0
    %v311 = vand.u32 %v73, 4294901760
    %v312 = vsub.f32 %v73, %v311
    %v313 = vand.u32 %v312, 4294901760
    %v314 = vsub.f32 %v312, %v313
    %v315 = vand.u32 %v314, 4294901760
    %316 = vmatpush1.msra.mxu0 %v315
    %317 = vmatprep.subr.mxu0 0.0
    %v318 = vand.u32 %v74, 4294901760
    %v319 = vsub.f32 %v74, %v318
    %v320 = vand.u32 %v319, 4294901760
    %v321 = vsub.f32 %v319, %v320
    %v322 = vand.u32 %v321, 4294901760
    %323 = vmatpush1.msra.mxu0 %v322
    %324 = vmatprep.subr.mxu0 0.0
    %v325 = vand.u32 %v75, 4294901760
    %v326 = vsub.f32 %v75, %v325
    %v327 = vand.u32 %v326, 4294901760
    %v328 = vsub.f32 %v326, %v327
    %v329 = vand.u32 %v328, 4294901760
    %330 = vmatpush1.msra.mxu0 %v329
    %331 = vmatprep.subr.mxu0 0.0
    %v332 = vand.u32 %v76, 4294901760
    %v333 = vsub.f32 %v76, %v332
    %v334 = vand.u32 %v333, 4294901760
    %v335 = vsub.f32 %v333, %v334
    %v336 = vand.u32 %v335, 4294901760
    %337 = vmatpush1.msra.mxu0 %v336
    %338 = vmatprep.subr.mxu0 0.0
    %v339 = vand.u32 %v77, 4294901760
    %v340 = vsub.f32 %v77, %v339
    %v341 = vand.u32 %v340, 4294901760
    %v342 = vsub.f32 %v340, %v341
    %v343 = vand.u32 %v342, 4294901760
    %344 = vmatpush1.msra.mxu0 %v343
    %345 = vmatprep.subr.mxu0 0.0
    %v346 = vand.u32 %v78, 4294901760
    %v347 = vsub.f32 %v78, %v346
    %v348 = vand.u32 %v347, 4294901760
    %v349 = vsub.f32 %v347, %v348
    %v350 = vand.u32 %v349, 4294901760
    %351 = vmatpush1.msra.mxu0 %v350
    %352 = vmatprep.subr.mxu0 0.0
    %v353 = vand.u32 %v79, 4294901760
    %v354 = vsub.f32 %v79, %v353
    %v355 = vand.u32 %v354, 4294901760
    %v356 = vsub.f32 %v354, %v355
    %v357 = vand.u32 %v356, 4294901760
    %358 = vmatpush1.msra.mxu0 %v357
    %359 = vmatprep.subr.mxu0 0.0
    %v360 = vand.u32 %v80, 4294901760
    %v361 = vsub.f32 %v80, %v360
    %v362 = vand.u32 %v361, 4294901760
    %v363 = vsub.f32 %v361, %v362
    %v364 = vand.u32 %v363, 4294901760
    %365 = vmatpush1.msra.mxu0 %v364
    %366 = vmatprep.subr.mxu0 0.0
    %v367 = vand.u32 %v81, 4294901760
    %v368 = vsub.f32 %v81, %v367
    %v369 = vand.u32 %v368, 4294901760
    %v370 = vsub.f32 %v368, %v369
    %v371 = vand.u32 %v370, 4294901760
    %372 = vmatpush1.msra.mxu0 %v371
    %373 = vmatprep.subr.mxu0 0.0
    %v374 = vand.u32 %v82, 4294901760
    %v375 = vsub.f32 %v82, %v374
    %v376 = vand.u32 %v375, 4294901760
    %v377 = vsub.f32 %v375, %v376
    %v378 = vand.u32 %v377, 4294901760
    %379 = vmatpush1.msra.mxu0 %v378
    %380 = vmatprep.subr.mxu0 0.0
    %v381 = vand.u32 %v83, 4294901760
    %v382 = vsub.f32 %v83, %v381
    %v383 = vand.u32 %v382, 4294901760
    %v384 = vsub.f32 %v382, %v383
    %v385 = vand.u32 %v384, 4294901760
    %386 = vmatpush1.msra.mxu0 %v385
    %387 = vmatprep.subr.mxu0 0.0
    %v388 = vand.u32 %v84, 4294901760
    %v389 = vsub.f32 %v84, %v388
    %v390 = vand.u32 %v389, 4294901760
    %v391 = vsub.f32 %v389, %v390
    %v392 = vand.u32 %v391, 4294901760
    %393 = vmatpush1.msra.mxu0 %v392
    %394 = vmatprep.subr.mxu0 0.0
    %v395 = vand.u32 %v85, 4294901760
    %v396 = vsub.f32 %v85, %v395
    %v397 = vand.u32 %v396, 4294901760
    %v398 = vsub.f32 %v396, %v397
    %v399 = vand.u32 %v398, 4294901760
    %400 = vmatpush1.msra.mxu0 %v399
    %401 = vmatprep.subr.mxu0 0.0
    %v402 = vand.u32 %v86, 4294901760
    %v403 = vsub.f32 %v86, %v402
    %v404 = vand.u32 %v403, 4294901760
    %v405 = vsub.f32 %v403, %v404
    %v406 = vand.u32 %v405, 4294901760
    %407 = vmatpush1.msra.mxu0 %v406
    %408 = vmatprep.subr.mxu0 0.0
    %v409 = vand.u32 %v87, 4294901760
    %v410 = vsub.f32 %v87, %v409
    %v411 = vand.u32 %v410, 4294901760
    %v412 = vsub.f32 %v410, %v411
    %v413 = vand.u32 %v412, 4294901760
    %414 = vmatpush1.msra.mxu0 %v413
    %415 = vmatprep.subr.mxu0 0.0
    %v416 = vand.u32 %v88, 4294901760
    %v417 = vsub.f32 %v88, %v416
    %v418 = vand.u32 %v417, 4294901760
    %v419 = vsub.f32 %v417, %v418
    %v420 = vand.u32 %v419, 4294901760
    %421 = vmatpush1.msra.mxu0 %v420
    %422 = vmatprep.subr.mxu0 0.0
    %v423 = vand.u32 %v89, 4294901760
    %v424 = vsub.f32 %v89, %v423
    %v425 = vand.u32 %v424, 4294901760
    %v426 = vsub.f32 %v424, %v425
    %v427 = vand.u32 %v426, 4294901760
    %428 = vmatpush1.msra.mxu0 %v427
    %429 = vmatprep.subr.mxu0 0.0
    %v430 = vand.u32 %v90, 4294901760
    %v431 = vsub.f32 %v90, %v430
    %v432 = vand.u32 %v431, 4294901760
    %v433 = vsub.f32 %v431, %v432
    %v434 = vand.u32 %v433, 4294901760
    %435 = vmatpush1.msra.mxu0 %v434
    %436 = vmatprep.subr.mxu0 0.0
    %v437 = vand.u32 %v91, 4294901760
    %v438 = vsub.f32 %v91, %v437
    %v439 = vand.u32 %v438, 4294901760
    %v440 = vsub.f32 %v438, %v439
    %v441 = vand.u32 %v440, 4294901760
    %442 = vmatpush1.msra.mxu0 %v441
    %443 = vmatprep.subr.mxu0 0.0
    %v444 = vand.u32 %v92, 4294901760
    %v445 = vsub.f32 %v92, %v444
    %v446 = vand.u32 %v445, 4294901760
    %v447 = vsub.f32 %v445, %v446
    %v448 = vand.u32 %v447, 4294901760
    %449 = vmatpush1.msra.mxu0 %v448
    %450 = vmatprep.subr.mxu0 0.0
    %v451 = vand.u32 %v93, 4294901760
    %v452 = vsub.f32 %v93, %v451
    %v453 = vand.u32 %v452, 4294901760
    %v454 = vsub.f32 %v452, %v453
    %v455 = vand.u32 %v454, 4294901760
    %456 = vmatpush1.msra.mxu0 %v455
    %457 = vmatprep.subr.mxu0 0.0
    %v458 = vand.u32 %v94, 4294901760
    %v459 = vsub.f32 %v94, %v458
    %v460 = vand.u32 %v459, 4294901760
    %v461 = vsub.f32 %v459, %v460
    %v462 = vand.u32 %v461, 4294901760
    %463 = vmatpush1.msra.mxu0 %v462
    %464 = vmatprep.subr.mxu0 0.0
    %v465 = vand.u32 %v95, 4294901760
    %v466 = vsub.f32 %v95, %v465
    %v467 = vand.u32 %v466, 4294901760
    %v468 = vsub.f32 %v466, %v467
    %v469 = vand.u32 %v468, 4294901760
    %470 = vmatpush1.msra.mxu0 %v469
    %v471 = vand.u32 %v61, 4294901760
    %472 = vmatprep.mubr.f32.mxu0 %v471
    %v473 = vand.u32 %v60, 4294901760
    %474 = vmatmul.mubr.f32.gmra.mrb[0].mxu0 %v473
    %v475 = vpop.f32.mrb[0].mxu0
    %v476 = vadd.f32 %v244, %v475
    %v477 = vpop.f32.mrb[0].mxu0
    %478 = vdwg.mxu0
    %479 = vmatprep.subr.mxu0 0.0
    %v480 = vand.u32 %v64, 4294901760
    %v481 = vsub.f32 %v64, %v480
    %482 = vmatpush1.msra.mxu0 %v481
    %483 = vmatprep.subr.mxu0 0.0
    %v484 = vand.u32 %v65, 4294901760
    %v485 = vsub.f32 %v65, %v484
    %486 = vmatpush1.msra.mxu0 %v485
    %487 = vmatprep.subr.mxu0 0.0
    %v488 = vand.u32 %v66, 4294901760
    %v489 = vsub.f32 %v66, %v488
    %490 = vmatpush1.msra.mxu0 %v489
    %491 = vmatprep.subr.mxu0 0.0
    %v492 = vand.u32 %v67, 4294901760
    %v493 = vsub.f32 %v67, %v492
    %494 = vmatpush1.msra.mxu0 %v493
    %495 = vmatprep.subr.mxu0 0.0
    %v496 = vand.u32 %v68, 4294901760
    %v497 = vsub.f32 %v68, %v496
    %498 = vmatpush1.msra.mxu0 %v497
    %499 = vmatprep.subr.mxu0 0.0
    %v500 = vand.u32 %v69, 4294901760
    %v501 = vsub.f32 %v69, %v500
    %502 = vmatpush1.msra.mxu0 %v501
    %503 = vmatprep.subr.mxu0 0.0
    %v504 = vand.u32 %v70, 4294901760
    %v505 = vsub.f32 %v70, %v504
    %506 = vmatpush1.msra.mxu0 %v505
    %507 = vmatprep.subr.mxu0 0.0
    %v508 = vand.u32 %v71, 4294901760
    %v509 = vsub.f32 %v71, %v508
    %510 = vmatpush1.msra.mxu0 %v509
    %511 = vmatprep.subr.mxu0 0.0
    %v512 = vand.u32 %v72, 4294901760
    %v513 = vsub.f32 %v72, %v512
    %514 = vmatpush1.msra.mxu0 %v513
    %515 = vmatprep.subr.mxu0 0.0
    %v516 = vand.u32 %v73, 4294901760
    %v517 = vsub.f32 %v73, %v516
    %518 = vmatpush1.msra.mxu0 %v517
    %519 = vmatprep.subr.mxu0 0.0
    %v520 = vand.u32 %v74, 4294901760
    %v521 = vsub.f32 %v74, %v520
    %522 = vmatpush1.msra.mxu0 %v521
    %523 = vmatprep.subr.mxu0 0.0
    %v524 = vand.u32 %v75, 4294901760
    %v525 = vsub.f32 %v75, %v524
    %526 = vmatpush1.msra.mxu0 %v525
    %527 = vmatprep.subr.mxu0 0.0
    %v528 = vand.u32 %v76, 4294901760
    %v529 = vsub.f32 %v76, %v528
    %530 = vmatpush1.msra.mxu0 %v529
    %531 = vmatprep.subr.mxu0 0.0
    %v532 = vand.u32 %v77, 4294901760
    %v533 = vsub.f32 %v77, %v532
    %534 = vmatpush1.msra.mxu0 %v533
    %535 = vmatprep.subr.mxu0 0.0
    %v536 = vand.u32 %v78, 4294901760
    %v537 = vsub.f32 %v78, %v536
    %538 = vmatpush1.msra.mxu0 %v537
    %539 = vmatprep.subr.mxu0 0.0
    %v540 = vand.u32 %v79, 4294901760
    %v541 = vsub.f32 %v79, %v540
    %542 = vmatpush1.msra.mxu0 %v541
    %543 = vmatprep.subr.mxu0 0.0
    %v544 = vand.u32 %v80, 4294901760
    %v545 = vsub.f32 %v80, %v544
    %546 = vmatpush1.msra.mxu0 %v545
    %547 = vmatprep.subr.mxu0 0.0
    %v548 = vand.u32 %v81, 4294901760
    %v549 = vsub.f32 %v81, %v548
    %550 = vmatpush1.msra.mxu0 %v549
    %551 = vmatprep.subr.mxu0 0.0
    %v552 = vand.u32 %v82, 4294901760
    %v553 = vsub.f32 %v82, %v552
    %554 = vmatpush1.msra.mxu0 %v553
    %555 = vmatprep.subr.mxu0 0.0
    %v556 = vand.u32 %v83, 4294901760
    %v557 = vsub.f32 %v83, %v556
    %558 = vmatpush1.msra.mxu0 %v557
    %559 = vmatprep.subr.mxu0 0.0
    %v560 = vand.u32 %v84, 4294901760
    %v561 = vsub.f32 %v84, %v560
    %562 = vmatpush1.msra.mxu0 %v561
    %563 = vmatprep.subr.mxu0 0.0
    %v564 = vand.u32 %v85, 4294901760
    %v565 = vsub.f32 %v85, %v564
    %566 = vmatpush1.msra.mxu0 %v565
    %567 = vmatprep.subr.mxu0 0.0
    %v568 = vand.u32 %v86, 4294901760
    %v569 = vsub.f32 %v86, %v568
    %570 = vmatpush1.msra.mxu0 %v569
    %571 = vmatprep.subr.mxu0 0.0
    %v572 = vand.u32 %v87, 4294901760
    %v573 = vsub.f32 %v87, %v572
    %574 = vmatpush1.msra.mxu0 %v573
    %575 = vmatprep.subr.mxu0 0.0
    %v576 = vand.u32 %v88, 4294901760
    %v577 = vsub.f32 %v88, %v576
    %578 = vmatpush1.msra.mxu0 %v577
    %579 = vmatprep.subr.mxu0 0.0
    %v580 = vand.u32 %v89, 4294901760
    %v581 = vsub.f32 %v89, %v580
    %582 = vmatpush1.msra.mxu0 %v581
    %583 = vmatprep.subr.mxu0 0.0
    %v584 = vand.u32 %v90, 4294901760
    %v585 = vsub.f32 %v90, %v584
    %586 = vmatpush1.msra.mxu0 %v585
    %587 = vmatprep.subr.mxu0 0.0
    %v588 = vand.u32 %v91, 4294901760
    %v589 = vsub.f32 %v91, %v588
    %590 = vmatpush1.msra.mxu0 %v589
    %591 = vmatprep.subr.mxu0 0.0
    %v592 = vand.u32 %v92, 4294901760
    %v593 = vsub.f32 %v92, %v592
    %594 = vmatpush1.msra.mxu0 %v593
    %595 = vmatprep.subr.mxu0 0.0
    %v596 = vand.u32 %v93, 4294901760
    %v597 = vsub.f32 %v93, %v596
    %598 = vmatpush1.msra.mxu0 %v597
    %599 = vmatprep.subr.mxu0 0.0
    %v600 = vand.u32 %v94, 4294901760
    %v601 = vsub.f32 %v94, %v600
    %602 = vmatpush1.msra.mxu0 %v601
    %603 = vmatprep.subr.mxu0 0.0
    %v604 = vand.u32 %v95, 4294901760
    %v605 = vsub.f32 %v95, %v604
    %606 = vmatpush1.msra.mxu0 %v605
    %v607 = vand.u32 %v61, 4294901760
    %v608 = vsub.f32 %v61, %v607
    %609 = vmatprep.mubr.f32.mxu0 %v608
    %v610 = vand.u32 %v60, 4294901760
    %v611 = vsub.f32 %v60, %v610
    %612 = vmatmul.mubr.f32.gmra.mrb[0].mxu0 %v611
    %v613 = vpop.f32.mrb[0].mxu0
    %v614 = vadd.f32 %v476, %v613
    %v615 = vpop.f32.mrb[0].mxu0
    %616 = vdwg.mxu0
    %617 = vmatprep.subr.mxu0 0.0
    %v618 = vand.u32 %v64, 4294901760
    %619 = vmatpush1.msra.mxu0 %v618
    %620 = vmatprep.subr.mxu0 0.0
    %v621 = vand.u32 %v65, 4294901760
    %622 = vmatpush1.msra.mxu0 %v621
    %623 = vmatprep.subr.mxu0 0.0
    %v624 = vand.u32 %v66, 4294901760
    %625 = vmatpush1.msra.mxu0 %v624
    %626 = vmatprep.subr.mxu0 0.0
    %v627 = vand.u32 %v67, 4294901760
    %628 = vmatpush1.msra.mxu0 %v627
    %629 = vmatprep.subr.mxu0 0.0
    %v630 = vand.u32 %v68, 4294901760
    %631 = vmatpush1.msra.mxu0 %v630
    %632 = vmatprep.subr.mxu0 0.0
    %v633 = vand.u32 %v69, 4294901760
    %634 = vmatpush1.msra.mxu0 %v633
    %635 = vmatprep.subr.mxu0 0.0
    %v636 = vand.u32 %v70, 4294901760
    %637 = vmatpush1.msra.mxu0 %v636
    %638 = vmatprep.subr.mxu0 0.0
    %v639 = vand.u32 %v71, 4294901760
    %640 = vmatpush1.msra.mxu0 %v639
    %641 = vmatprep.subr.mxu0 0.0
    %v642 = vand.u32 %v72, 4294901760
    %643 = vmatpush1.msra.mxu0 %v642
    %644 = vmatprep.subr.mxu0 0.0
    %v645 = vand.u32 %v73, 4294901760
    %646 = vmatpush1.msra.mxu0 %v645
    %647 = vmatprep.subr.mxu0 0.0
    %v648 = vand.u32 %v74, 4294901760
    %649 = vmatpush1.msra.mxu0 %v648
    %650 = vmatprep.subr.mxu0 0.0
    %v651 = vand.u32 %v75, 4294901760
    %652 = vmatpush1.msra.mxu0 %v651
    %653 = vmatprep.subr.mxu0 0.0
    %v654 = vand.u32 %v76, 4294901760
    %655 = vmatpush1.msra.mxu0 %v654
    %656 = vmatprep.subr.mxu0 0.0
    %v657 = vand.u32 %v77, 4294901760
    %658 = vmatpush1.msra.mxu0 %v657
    %659 = vmatprep.subr.mxu0 0.0
    %v660 = vand.u32 %v78, 4294901760
    %661 = vmatpush1.msra.mxu0 %v660
    %662 = vmatprep.subr.mxu0 0.0
    %v663 = vand.u32 %v79, 4294901760
    %664 = vmatpush1.msra.mxu0 %v663
    %665 = vmatprep.subr.mxu0 0.0
    %v666 = vand.u32 %v80, 4294901760
    %667 = vmatpush1.msra.mxu0 %v666
    %668 = vmatprep.subr.mxu0 0.0
    %v669 = vand.u32 %v81, 4294901760
    %670 = vmatpush1.msra.mxu0 %v669
    %671 = vmatprep.subr.mxu0 0.0
    %v672 = vand.u32 %v82, 4294901760
    %673 = vmatpush1.msra.mxu0 %v672
    %674 = vmatprep.subr.mxu0 0.0
    %v675 = vand.u32 %v83, 4294901760
    %676 = vmatpush1.msra.mxu0 %v675
    %677 = vmatprep.subr.mxu0 0.0
    %v678 = vand.u32 %v84, 4294901760
    %679 = vmatpush1.msra.mxu0 %v678
    %680 = vmatprep.subr.mxu0 0.0
    %v681 = vand.u32 %v85, 4294901760
    %682 = vmatpush1.msra.mxu0 %v681
    %683 = vmatprep.subr.mxu0 0.0
    %v684 = vand.u32 %v86, 4294901760
    %685 = vmatpush1.msra.mxu0 %v684
    %686 = vmatprep.subr.mxu0 0.0
    %v687 = vand.u32 %v87, 4294901760
    %688 = vmatpush1.msra.mxu0 %v687
    %689 = vmatprep.subr.mxu0 0.0
    %v690 = vand.u32 %v88, 4294901760
    %691 = vmatpush1.msra.mxu0 %v690
    %692 = vmatprep.subr.mxu0 0.0
    %v693 = vand.u32 %v89, 4294901760
    %694 = vmatpush1.msra.mxu0 %v693
    %695 = vmatprep.subr.mxu0 0.0
    %v696 = vand.u32 %v90, 4294901760
    %697 = vmatpush1.msra.mxu0 %v696
    %698 = vmatprep.subr.mxu0 0.0
    %v699 = vand.u32 %v91, 4294901760
    %700 = vmatpush1.msra.mxu0 %v699
    %701 = vmatprep.subr.mxu0 0.0
    %v702 = vand.u32 %v92, 4294901760
    %703 = vmatpush1.msra.mxu0 %v702
    %704 = vmatprep.subr.mxu0 0.0
    %v705 = vand.u32 %v93, 4294901760
    %706 = vmatpush1.msra.mxu0 %v705
    %707 = vmatprep.subr.mxu0 0.0
    %v708 = vand.u32 %v94, 4294901760
    %709 = vmatpush1.msra.mxu0 %v708
    %710 = vmatprep.subr.mxu0 0.0
    %v711 = vand.u32 %v95, 4294901760
    %712 = vmatpush1.msra.mxu0 %v711
    %v713 = vand.u32 %v61, 4294901760
    %v714 = vsub.f32 %v61, %v713
    %v715 = vand.u32 %v714, 4294901760
    %716 = vmatprep.mubr.f32.mxu0 %v715
    %v717 = vand.u32 %v60, 4294901760
    %v718 = vsub.f32 %v60, %v717
    %v719 = vand.u32 %v718, 4294901760
    %720 = vmatmul.mubr.f32.gmra.mrb[0].mxu0 %v719
    %v721 = vpop.f32.mrb[0].mxu0
    %v722 = vadd.f32 %v614, %v721
    %v723 = vpop.f32.mrb[0].mxu0
    %724 = vdwg.mxu0
    %725 = vmatprep.subr.mxu0 0.0
    %v726 = vand.u32 %v64, 4294901760
    %v727 = vsub.f32 %v64, %v726
    %v728 = vand.u32 %v727, 4294901760
    %729 = vmatpush1.msra.mxu0 %v728
    %730 = vmatprep.subr.mxu0 0.0
    %v731 = vand.u32 %v65, 4294901760
    %v732 = vsub.f32 %v65, %v731
    %v733 = vand.u32 %v732, 4294901760
    %734 = vmatpush1.msra.mxu0 %v733
    %735 = vmatprep.subr.mxu0 0.0
    %v736 = vand.u32 %v66, 4294901760
    %v737 = vsub.f32 %v66, %v736
    %v738 = vand.u32 %v737, 4294901760
    %739 = vmatpush1.msra.mxu0 %v738
    %740 = vmatprep.subr.mxu0 0.0
    %v741 = vand.u32 %v67, 4294901760
    %v742 = vsub.f32 %v67, %v741
    %v743 = vand.u32 %v742, 4294901760
    %744 = vmatpush1.msra.mxu0 %v743
    %745 = vmatprep.subr.mxu0 0.0
    %v746 = vand.u32 %v68, 4294901760
    %v747 = vsub.f32 %v68, %v746
    %v748 = vand.u32 %v747, 4294901760
    %749 = vmatpush1.msra.mxu0 %v748
    %750 = vmatprep.subr.mxu0 0.0
    %v751 = vand.u32 %v69, 4294901760
    %v752 = vsub.f32 %v69, %v751
    %v753 = vand.u32 %v752, 4294901760
    %754 = vmatpush1.msra.mxu0 %v753
    %755 = vmatprep.subr.mxu0 0.0
    %v756 = vand.u32 %v70, 4294901760
    %v757 = vsub.f32 %v70, %v756
    %v758 = vand.u32 %v757, 4294901760
    %759 = vmatpush1.msra.mxu0 %v758
    %760 = vmatprep.subr.mxu0 0.0
    %v761 = vand.u32 %v71, 4294901760
    %v762 = vsub.f32 %v71, %v761
    %v763 = vand.u32 %v762, 4294901760
    %764 = vmatpush1.msra.mxu0 %v763
    %765 = vmatprep.subr.mxu0 0.0
    %v766 = vand.u32 %v72, 4294901760
    %v767 = vsub.f32 %v72, %v766
    %v768 = vand.u32 %v767, 4294901760
    %769 = vmatpush1.msra.mxu0 %v768
    %770 = vmatprep.subr.mxu0 0.0
    %v771 = vand.u32 %v73, 4294901760
    %v772 = vsub.f32 %v73, %v771
    %v773 = vand.u32 %v772, 4294901760
    %774 = vmatpush1.msra.mxu0 %v773
    %775 = vmatprep.subr.mxu0 0.0
    %v776 = vand.u32 %v74, 4294901760
    %v777 = vsub.f32 %v74, %v776
    %v778 = vand.u32 %v777, 4294901760
    %779 = vmatpush1.msra.mxu0 %v778
    %780 = vmatprep.subr.mxu0 0.0
    %v781 = vand.u32 %v75, 4294901760
    %v782 = vsub.f32 %v75, %v781
    %v783 = vand.u32 %v782, 4294901760
    %784 = vmatpush1.msra.mxu0 %v783
    %785 = vmatprep.subr.mxu0 0.0
    %v786 = vand.u32 %v76, 4294901760
    %v787 = vsub.f32 %v76, %v786
    %v788 = vand.u32 %v787, 4294901760
    %789 = vmatpush1.msra.mxu0 %v788
    %790 = vmatprep.subr.mxu0 0.0
    %v791 = vand.u32 %v77, 4294901760
    %v792 = vsub.f32 %v77, %v791
    %v793 = vand.u32 %v792, 4294901760
    %794 = vmatpush1.msra.mxu0 %v793
    %795 = vmatprep.subr.mxu0 0.0
    %v796 = vand.u32 %v78, 4294901760
    %v797 = vsub.f32 %v78, %v796
    %v798 = vand.u32 %v797, 4294901760
    %799 = vmatpush1.msra.mxu0 %v798
    %800 = vmatprep.subr.mxu0 0.0
    %v801 = vand.u32 %v79, 4294901760
    %v802 = vsub.f32 %v79, %v801
    %v803 = vand.u32 %v802, 4294901760
    %804 = vmatpush1.msra.mxu0 %v803
    %805 = vmatprep.subr.mxu0 0.0
    %v806 = vand.u32 %v80, 4294901760
    %v807 = vsub.f32 %v80, %v806
    %v808 = vand.u32 %v807, 4294901760
    %809 = vmatpush1.msra.mxu0 %v808
    %810 = vmatprep.subr.mxu0 0.0
    %v811 = vand.u32 %v81, 4294901760
    %v812 = vsub.f32 %v81, %v811
    %v813 = vand.u32 %v812, 4294901760
    %814 = vmatpush1.msra.mxu0 %v813
    %815 = vmatprep.subr.mxu0 0.0
    %v816 = vand.u32 %v82, 4294901760
    %v817 = vsub.f32 %v82, %v816
    %v818 = vand.u32 %v817, 4294901760
    %819 = vmatpush1.msra.mxu0 %v818
    %820 = vmatprep.subr.mxu0 0.0
    %v821 = vand.u32 %v83, 4294901760
    %v822 = vsub.f32 %v83, %v821
    %v823 = vand.u32 %v822, 4294901760
    %824 = vmatpush1.msra.mxu0 %v823
    %825 = vmatprep.subr.mxu0 0.0
    %v826 = vand.u32 %v84, 4294901760
    %v827 = vsub.f32 %v84, %v826
    %v828 = vand.u32 %v827, 4294901760
    %829 = vmatpush1.msra.mxu0 %v828
    %830 = vmatprep.subr.mxu0 0.0
    %v831 = vand.u32 %v85, 4294901760
    %v832 = vsub.f32 %v85, %v831
    %v833 = vand.u32 %v832, 4294901760
    %834 = vmatpush1.msra.mxu0 %v833
    %835 = vmatprep.subr.mxu0 0.0
    %v836 = vand.u32 %v86, 4294901760
    %v837 = vsub.f32 %v86, %v836
    %v838 = vand.u32 %v837, 4294901760
    %839 = vmatpush1.msra.mxu0 %v838
    %840 = vmatprep.subr.mxu0 0.0
    %v841 = vand.u32 %v87, 4294901760
    %v842 = vsub.f32 %v87, %v841
    %v843 = vand.u32 %v842, 4294901760
    %844 = vmatpush1.msra.mxu0 %v843
    %845 = vmatprep.subr.mxu0 0.0
    %v846 = vand.u32 %v88, 4294901760
    %v847 = vsub.f32 %v88, %v846
    %v848 = vand.u32 %v847, 4294901760
    %849 = vmatpush1.msra.mxu0 %v848
    %850 = vmatprep.subr.mxu0 0.0
    %v851 = vand.u32 %v89, 4294901760
    %v852 = vsub.f32 %v89, %v851
    %v853 = vand.u32 %v852, 4294901760
    %854 = vmatpush1.msra.mxu0 %v853
    %855 = vmatprep.subr.mxu0 0.0
    %v856 = vand.u32 %v90, 4294901760
    %v857 = vsub.f32 %v90, %v856
    %v858 = vand.u32 %v857, 4294901760
    %859 = vmatpush1.msra.mxu0 %v858
    %860 = vmatprep.subr.mxu0 0.0
    %v861 = vand.u32 %v91, 4294901760
    %v862 = vsub.f32 %v91, %v861
    %v863 = vand.u32 %v862, 4294901760
    %864 = vmatpush1.msra.mxu0 %v863
    %865 = vmatprep.subr.mxu0 0.0
    %v866 = vand.u32 %v92, 4294901760
    %v867 = vsub.f32 %v92, %v866
    %v868 = vand.u32 %v867, 4294901760
    %869 = vmatpush1.msra.mxu0 %v868
    %870 = vmatprep.subr.mxu0 0.0
    %v871 = vand.u32 %v93, 4294901760
    %v872 = vsub.f32 %v93, %v871
    %v873 = vand.u32 %v872, 4294901760
    %874 = vmatpush1.msra.mxu0 %v873
    %875 = vmatprep.subr.mxu0 0.0
    %v876 = vand.u32 %v94, 4294901760
    %v877 = vsub.f32 %v94, %v876
    %v878 = vand.u32 %v877, 4294901760
    %879 = vmatpush1.msra.mxu0 %v878
    %880 = vmatprep.subr.mxu0 0.0
    %v881 = vand.u32 %v95, 4294901760
    %v882 = vsub.f32 %v95, %v881
    %v883 = vand.u32 %v882, 4294901760
    %884 = vmatpush1.msra.mxu0 %v883
    %v885 = vand.u32 %v61, 4294901760
    %886 = vmatprep.mubr.f32.mxu0 %v885
    %v887 = vand.u32 %v60, 4294901760
    %888 = vmatmul.mubr.f32.gmra.mrb[0].mxu0 %v887
    %v889 = vpop.f32.mrb[0].mxu0
    %v890 = vadd.f32 %v722, %v889
    %v891 = vpop.f32.mrb[0].mxu0
    %892 = vdwg.mxu0
    %893 = vmatprep.subr.mxu0 0.0
    %v894 = vand.u32 %v64, 4294901760
    %895 = vmatpush1.msra.mxu0 %v894
    %896 = vmatprep.subr.mxu0 0.0
    %v897 = vand.u32 %v65, 4294901760
    %898 = vmatpush1.msra.mxu0 %v897
    %899 = vmatprep.subr.mxu0 0.0
    %v900 = vand.u32 %v66, 4294901760
    %901 = vmatpush1.msra.mxu0 %v900
    %902 = vmatprep.subr.mxu0 0.0
    %v903 = vand.u32 %v67, 4294901760
    %904 = vmatpush1.msra.mxu0 %v903
    %905 = vmatprep.subr.mxu0 0.0
    %v906 = vand.u32 %v68, 4294901760
    %907 = vmatpush1.msra.mxu0 %v906
    %908 = vmatprep.subr.mxu0 0.0
    %v909 = vand.u32 %v69, 4294901760
    %910 = vmatpush1.msra.mxu0 %v909
    %911 = vmatprep.subr.mxu0 0.0
    %v912 = vand.u32 %v70, 4294901760
    %913 = vmatpush1.msra.mxu0 %v912
    %914 = vmatprep.subr.mxu0 0.0
    %v915 = vand.u32 %v71, 4294901760
    %916 = vmatpush1.msra.mxu0 %v915
    %917 = vmatprep.subr.mxu0 0.0
    %v918 = vand.u32 %v72, 4294901760
    %919 = vmatpush1.msra.mxu0 %v918
    %920 = vmatprep.subr.mxu0 0.0
    %v921 = vand.u32 %v73, 4294901760
    %922 = vmatpush1.msra.mxu0 %v921
    %923 = vmatprep.subr.mxu0 0.0
    %v924 = vand.u32 %v74, 4294901760
    %925 = vmatpush1.msra.mxu0 %v924
    %926 = vmatprep.subr.mxu0 0.0
    %v927 = vand.u32 %v75, 4294901760
    %928 = vmatpush1.msra.mxu0 %v927
    %929 = vmatprep.subr.mxu0 0.0
    %v930 = vand.u32 %v76, 4294901760
    %931 = vmatpush1.msra.mxu0 %v930
    %932 = vmatprep.subr.mxu0 0.0
    %v933 = vand.u32 %v77, 4294901760
    %934 = vmatpush1.msra.mxu0 %v933
    %935 = vmatprep.subr.mxu0 0.0
    %v936 = vand.u32 %v78, 4294901760
    %937 = vmatpush1.msra.mxu0 %v936
    %938 = vmatprep.subr.mxu0 0.0
    %v939 = vand.u32 %v79, 4294901760
    %940 = vmatpush1.msra.mxu0 %v939
    %941 = vmatprep.subr.mxu0 0.0
    %v942 = vand.u32 %v80, 4294901760
    %943 = vmatpush1.msra.mxu0 %v942
    %944 = vmatprep.subr.mxu0 0.0
    %v945 = vand.u32 %v81, 4294901760
    %946 = vmatpush1.msra.mxu0 %v945
    %947 = vmatprep.subr.mxu0 0.0
    %v948 = vand.u32 %v82, 4294901760
    %949 = vmatpush1.msra.mxu0 %v948
    %950 = vmatprep.subr.mxu0 0.0
    %v951 = vand.u32 %v83, 4294901760
    %952 = vmatpush1.msra.mxu0 %v951
    %953 = vmatprep.subr.mxu0 0.0
    %v954 = vand.u32 %v84, 4294901760
    %955 = vmatpush1.msra.mxu0 %v954
    %956 = vmatprep.subr.mxu0 0.0
    %v957 = vand.u32 %v85, 4294901760
    %958 = vmatpush1.msra.mxu0 %v957
    %959 = vmatprep.subr.mxu0 0.0
    %v960 = vand.u32 %v86, 4294901760
    %961 = vmatpush1.msra.mxu0 %v960
    %962 = vmatprep.subr.mxu0 0.0
    %v963 = vand.u32 %v87, 4294901760
    %964 = vmatpush1.msra.mxu0 %v963
    %965 = vmatprep.subr.mxu0 0.0
    %v966 = vand.u32 %v88, 4294901760
    %967 = vmatpush1.msra.mxu0 %v966
    %968 = vmatprep.subr.mxu0 0.0
    %v969 = vand.u32 %v89, 4294901760
    %970 = vmatpush1.msra.mxu0 %v969
    %971 = vmatprep.subr.mxu0 0.0
    %v972 = vand.u32 %v90, 4294901760
    %973 = vmatpush1.msra.mxu0 %v972
    %974 = vmatprep.subr.mxu0 0.0
    %v975 = vand.u32 %v91, 4294901760
    %976 = vmatpush1.msra.mxu0 %v975
    %977 = vmatprep.subr.mxu0 0.0
    %v978 = vand.u32 %v92, 4294901760
    %979 = vmatpush1.msra.mxu0 %v978
    %980 = vmatprep.subr.mxu0 0.0
    %v981 = vand.u32 %v93, 4294901760
    %982 = vmatpush1.msra.mxu0 %v981
    %983 = vmatprep.subr.mxu0 0.0
    %v984 = vand.u32 %v94, 4294901760
    %985 = vmatpush1.msra.mxu0 %v984
    %986 = vmatprep.subr.mxu0 0.0
    %v987 = vand.u32 %v95, 4294901760
    %988 = vmatpush1.msra.mxu0 %v987
    %v989 = vand.u32 %v61, 4294901760
    %990 = vmatprep.mubr.f32.mxu0 %v989
    %v991 = vand.u32 %v60, 4294901760
    %992 = vmatmul.mubr.f32.gmra.mrb[0].mxu0 %v991
    %v993 = vpop.f32.mrb[0].mxu0
    %v994 = vadd.f32 %v890, %v993
    %v995 = vpop.f32.mrb[0].mxu0
    %996 = vdwg.mxu0
    %997 = vmatprep.subr.mxu0 0.0
    %v998 = vand.u32 %v96, 4294901760
    %999 = vmatpush1.msra.mxu0 %v998
    %1000 = vmatprep.subr.mxu0 0.0
    %v1001 = vand.u32 %v97, 4294901760
    %1002 = vmatpush1.msra.mxu0 %v1001
    %1003 = vmatprep.subr.mxu0 0.0
    %v1004 = vand.u32 %v98, 4294901760
    %1005 = vmatpush1.msra.mxu0 %v1004
    %1006 = vmatprep.subr.mxu0 0.0
    %v1007 = vand.u32 %v99, 4294901760
    %1008 = vmatpush1.msra.mxu0 %v1007
    %1009 = vmatprep.subr.mxu0 0.0
    %v1010 = vand.u32 %v100, 4294901760
    %1011 = vmatpush1.msra.mxu0 %v1010
    %1012 = vmatprep.subr.mxu0 0.0
    %v1013 = vand.u32 %v101, 4294901760
    %1014 = vmatpush1.msra.mxu0 %v1013
    %1015 = vmatprep.subr.mxu0 0.0
    %v1016 = vand.u32 %v102, 4294901760
    %1017 = vmatpush1.msra.mxu0 %v1016
    %1018 = vmatprep.subr.mxu0 0.0
    %v1019 = vand.u32 %v103, 4294901760
    %1020 = vmatpush1.msra.mxu0 %v1019
    %1021 = vmatprep.subr.mxu0 0.0
    %v1022 = vand.u32 %v104, 4294901760
    %1023 = vmatpush1.msra.mxu0 %v1022
    %1024 = vmatprep.subr.mxu0 0.0
    %v1025 = vand.u32 %v105, 4294901760
    %1026 = vmatpush1.msra.mxu0 %v1025
    %1027 = vmatprep.subr.mxu0 0.0
    %v1028 = vand.u32 %v106, 4294901760
    %1029 = vmatpush1.msra.mxu0 %v1028
    %1030 = vmatprep.subr.mxu0 0.0
    %v1031 = vand.u32 %v107, 4294901760
    %1032 = vmatpush1.msra.mxu0 %v1031
    %1033 = vmatprep.subr.mxu0 0.0
    %v1034 = vand.u32 %v108, 4294901760
    %1035 = vmatpush1.msra.mxu0 %v1034
    %1036 = vmatprep.subr.mxu0 0.0
    %v1037 = vand.u32 %v109, 4294901760
    %1038 = vmatpush1.msra.mxu0 %v1037
    %1039 = vmatprep.subr.mxu0 0.0
    %v1040 = vand.u32 %v110, 4294901760
    %1041 = vmatpush1.msra.mxu0 %v1040
    %1042 = vmatprep.subr.mxu0 0.0
    %v1043 = vand.u32 %v111, 4294901760
    %1044 = vmatpush1.msra.mxu0 %v1043
    %1045 = vmatprep.subr.mxu0 0.0
    %v1046 = vand.u32 %v112, 4294901760
    %1047 = vmatpush1.msra.mxu0 %v1046
    %1048 = vmatprep.subr.mxu0 0.0
    %v1049 = vand.u32 %v113, 4294901760
    %1050 = vmatpush1.msra.mxu0 %v1049
    %1051 = vmatprep.subr.mxu0 0.0
    %v1052 = vand.u32 %v114, 4294901760
    %1053 = vmatpush1.msra.mxu0 %v1052
    %1054 = vmatprep.subr.mxu0 0.0
    %v1055 = vand.u32 %v115, 4294901760
    %1056 = vmatpush1.msra.mxu0 %v1055
    %1057 = vmatprep.subr.mxu0 0.0
    %v1058 = vand.u32 %v116, 4294901760
    %1059 = vmatpush1.msra.mxu0 %v1058
    %1060 = vmatprep.subr.mxu0 0.0
    %v1061 = vand.u32 %v117, 4294901760
    %1062 = vmatpush1.msra.mxu0 %v1061
    %1063 = vmatprep.subr.mxu0 0.0
    %v1064 = vand.u32 %v118, 4294901760
    %1065 = vmatpush1.msra.mxu0 %v1064
    %1066 = vmatprep.subr.mxu0 0.0
    %v1067 = vand.u32 %v119, 4294901760
    %1068 = vmatpush1.msra.mxu0 %v1067
    %1069 = vmatprep.subr.mxu0 0.0
    %v1070 = vand.u32 %v120, 4294901760
    %1071 = vmatpush1.msra.mxu0 %v1070
    %1072 = vmatprep.subr.mxu0 0.0
    %v1073 = vand.u32 %v121, 4294901760
    %1074 = vmatpush1.msra.mxu0 %v1073
    %1075 = vmatprep.subr.mxu0 0.0
    %v1076 = vand.u32 %v122, 4294901760
    %1077 = vmatpush1.msra.mxu0 %v1076
    %1078 = vmatprep.subr.mxu0 0.0
    %v1079 = vand.u32 %v123, 4294901760
    %1080 = vmatpush1.msra.mxu0 %v1079
    %1081 = vmatprep.subr.mxu0 0.0
    %v1082 = vand.u32 %v124, 4294901760
    %1083 = vmatpush1.msra.mxu0 %v1082
    %1084 = vmatprep.subr.mxu0 0.0
    %v1085 = vand.u32 %v125, 4294901760
    %1086 = vmatpush1.msra.mxu0 %v1085
    %1087 = vmatprep.subr.mxu0 0.0
    %v1088 = vand.u32 %v126, 4294901760
    %1089 = vmatpush1.msra.mxu0 %v1088
    %1090 = vmatprep.subr.mxu0 0.0
    %v1091 = vand.u32 %v127, 4294901760
    %1092 = vmatpush1.msra.mxu0 %v1091
    %v1093 = vand.u32 %v63, 4294901760
    %v1094 = vsub.f32 %v63, %v1093
    %v1095 = vand.u32 %v1094, 4294901760
    %v1096 = vsub.f32 %v1094, %v1095
    %v1097 = vand.u32 %v1096, 4294901760
    %1098 = vmatprep.mubr.f32.mxu0 %v1097
    %v1099 = vand.u32 %v62, 4294901760
    %v1100 = vsub.f32 %v62, %v1099
    %v1101 = vand.u32 %v1100, 4294901760
    %v1102 = vsub.f32 %v1100, %v1101
    %v1103 = vand.u32 %v1102, 4294901760
    %1104 = vmatmul.mubr.f32.gmra.mrb[0].mxu0 %v1103
    %v1105 = vpop.f32.mrb[0].mxu0
    %v1106 = vadd.f32 %v994, %v1105
    %v1107 = vpop.f32.mrb[0].mxu0
    %1108 = vdwg.mxu0
    %1109 = vmatprep.subr.mxu0 0.0
    %v1110 = vand.u32 %v96, 4294901760
    %v1111 = vsub.f32 %v96, %v1110
    %v1112 = vand.u32 %v1111, 4294901760
    %v1113 = vsub.f32 %v1111, %v1112
    %v1114 = vand.u32 %v1113, 4294901760
    %1115 = vmatpush1.msra.mxu0 %v1114
    %1116 = vmatprep.subr.mxu0 0.0
    %v1117 = vand.u32 %v97, 4294901760
    %v1118 = vsub.f32 %v97, %v1117
    %v1119 = vand.u32 %v1118, 4294901760
    %v1120 = vsub.f32 %v1118, %v1119
    %v1121 = vand.u32 %v1120, 4294901760
    %1122 = vmatpush1.msra.mxu0 %v1121
    %1123 = vmatprep.subr.mxu0 0.0
    %v1124 = vand.u32 %v98, 4294901760
    %v1125 = vsub.f32 %v98, %v1124
    %v1126 = vand.u32 %v1125, 4294901760
    %v1127 = vsub.f32 %v1125, %v1126
    %v1128 = vand.u32 %v1127, 4294901760
    %1129 = vmatpush1.msra.mxu0 %v1128
    %1130 = vmatprep.subr.mxu0 0.0
    %v1131 = vand.u32 %v99, 4294901760
    %v1132 = vsub.f32 %v99, %v1131
    %v1133 = vand.u32 %v1132, 4294901760
    %v1134 = vsub.f32 %v1132, %v1133
    %v1135 = vand.u32 %v1134, 4294901760
    %1136 = vmatpush1.msra.mxu0 %v1135
    %1137 = vmatprep.subr.mxu0 0.0
    %v1138 = vand.u32 %v100, 4294901760
    %v1139 = vsub.f32 %v100, %v1138
    %v1140 = vand.u32 %v1139, 4294901760
    %v1141 = vsub.f32 %v1139, %v1140
    %v1142 = vand.u32 %v1141, 4294901760
    %1143 = vmatpush1.msra.mxu0 %v1142
    %1144 = vmatprep.subr.mxu0 0.0
    %v1145 = vand.u32 %v101, 4294901760
    %v1146 = vsub.f32 %v101, %v1145
    %v1147 = vand.u32 %v1146, 4294901760
    %v1148 = vsub.f32 %v1146, %v1147
    %v1149 = vand.u32 %v1148, 4294901760
    %1150 = vmatpush1.msra.mxu0 %v1149
    %1151 = vmatprep.subr.mxu0 0.0
    %v1152 = vand.u32 %v102, 4294901760
    %v1153 = vsub.f32 %v102, %v1152
    %v1154 = vand.u32 %v1153, 4294901760
    %v1155 = vsub.f32 %v1153, %v1154
    %v1156 = vand.u32 %v1155, 4294901760
    %1157 = vmatpush1.msra.mxu0 %v1156
    %1158 = vmatprep.subr.mxu0 0.0
    %v1159 = vand.u32 %v103, 4294901760
    %v1160 = vsub.f32 %v103, %v1159
    %v1161 = vand.u32 %v1160, 4294901760
    %v1162 = vsub.f32 %v1160, %v1161
    %v1163 = vand.u32 %v1162, 4294901760
    %1164 = vmatpush1.msra.mxu0 %v1163
    %1165 = vmatprep.subr.mxu0 0.0
    %v1166 = vand.u32 %v104, 4294901760
    %v1167 = vsub.f32 %v104, %v1166
    %v1168 = vand.u32 %v1167, 4294901760
    %v1169 = vsub.f32 %v1167, %v1168
    %v1170 = vand.u32 %v1169, 4294901760
    %1171 = vmatpush1.msra.mxu0 %v1170
    %1172 = vmatprep.subr.mxu0 0.0
    %v1173 = vand.u32 %v105, 4294901760
    %v1174 = vsub.f32 %v105, %v1173
    %v1175 = vand.u32 %v1174, 4294901760
    %v1176 = vsub.f32 %v1174, %v1175
    %v1177 = vand.u32 %v1176, 4294901760
    %1178 = vmatpush1.msra.mxu0 %v1177
    %1179 = vmatprep.subr.mxu0 0.0
    %v1180 = vand.u32 %v106, 4294901760
    %v1181 = vsub.f32 %v106, %v1180
    %v1182 = vand.u32 %v1181, 4294901760
    %v1183 = vsub.f32 %v1181, %v1182
    %v1184 = vand.u32 %v1183, 4294901760
    %1185 = vmatpush1.msra.mxu0 %v1184
    %1186 = vmatprep.subr.mxu0 0.0
    %v1187 = vand.u32 %v107, 4294901760
    %v1188 = vsub.f32 %v107, %v1187
    %v1189 = vand.u32 %v1188, 4294901760
    %v1190 = vsub.f32 %v1188, %v1189
    %v1191 = vand.u32 %v1190, 4294901760
    %1192 = vmatpush1.msra.mxu0 %v1191
    %1193 = vmatprep.subr.mxu0 0.0
    %v1194 = vand.u32 %v108, 4294901760
    %v1195 = vsub.f32 %v108, %v1194
    %v1196 = vand.u32 %v1195, 4294901760
    %v1197 = vsub.f32 %v1195, %v1196
    %v1198 = vand.u32 %v1197, 4294901760
    %1199 = vmatpush1.msra.mxu0 %v1198
    %1200 = vmatprep.subr.mxu0 0.0
    %v1201 = vand.u32 %v109, 4294901760
    %v1202 = vsub.f32 %v109, %v1201
    %v1203 = vand.u32 %v1202, 4294901760
    %v1204 = vsub.f32 %v1202, %v1203
    %v1205 = vand.u32 %v1204, 4294901760
    %1206 = vmatpush1.msra.mxu0 %v1205
    %1207 = vmatprep.subr.mxu0 0.0
    %v1208 = vand.u32 %v110, 4294901760
    %v1209 = vsub.f32 %v110, %v1208
    %v1210 = vand.u32 %v1209, 4294901760
    %v1211 = vsub.f32 %v1209, %v1210
    %v1212 = vand.u32 %v1211, 4294901760
    %1213 = vmatpush1.msra.mxu0 %v1212
    %1214 = vmatprep.subr.mxu0 0.0
    %v1215 = vand.u32 %v111, 4294901760
    %v1216 = vsub.f32 %v111, %v1215
    %v1217 = vand.u32 %v1216, 4294901760
    %v1218 = vsub.f32 %v1216, %v1217
    %v1219 = vand.u32 %v1218, 4294901760
    %1220 = vmatpush1.msra.mxu0 %v1219
    %1221 = vmatprep.subr.mxu0 0.0
    %v1222 = vand.u32 %v112, 4294901760
    %v1223 = vsub.f32 %v112, %v1222
    %v1224 = vand.u32 %v1223, 4294901760
    %v1225 = vsub.f32 %v1223, %v1224
    %v1226 = vand.u32 %v1225, 4294901760
    %1227 = vmatpush1.msra.mxu0 %v1226
    %1228 = vmatprep.subr.mxu0 0.0
    %v1229 = vand.u32 %v113, 4294901760
    %v1230 = vsub.f32 %v113, %v1229
    %v1231 = vand.u32 %v1230, 4294901760
    %v1232 = vsub.f32 %v1230, %v1231
    %v1233 = vand.u32 %v1232, 4294901760
    %1234 = vmatpush1.msra.mxu0 %v1233
    %1235 = vmatprep.subr.mxu0 0.0
    %v1236 = vand.u32 %v114, 4294901760
    %v1237 = vsub.f32 %v114, %v1236
    %v1238 = vand.u32 %v1237, 4294901760
    %v1239 = vsub.f32 %v1237, %v1238
    %v1240 = vand.u32 %v1239, 4294901760
    %1241 = vmatpush1.msra.mxu0 %v1240
    %1242 = vmatprep.subr.mxu0 0.0
    %v1243 = vand.u32 %v115, 4294901760
    %v1244 = vsub.f32 %v115, %v1243
    %v1245 = vand.u32 %v1244, 4294901760
    %v1246 = vsub.f32 %v1244, %v1245
    %v1247 = vand.u32 %v1246, 4294901760
    %1248 = vmatpush1.msra.mxu0 %v1247
    %1249 = vmatprep.subr.mxu0 0.0
    %v1250 = vand.u32 %v116, 4294901760
    %v1251 = vsub.f32 %v116, %v1250
    %v1252 = vand.u32 %v1251, 4294901760
    %v1253 = vsub.f32 %v1251, %v1252
    %v1254 = vand.u32 %v1253, 4294901760
    %1255 = vmatpush1.msra.mxu0 %v1254
    %1256 = vmatprep.subr.mxu0 0.0
    %v1257 = vand.u32 %v117, 4294901760
    %v1258 = vsub.f32 %v117, %v1257
    %v1259 = vand.u32 %v1258, 4294901760
    %v1260 = vsub.f32 %v1258, %v1259
    %v1261 = vand.u32 %v1260, 4294901760
    %1262 = vmatpush1.msra.mxu0 %v1261
    %1263 = vmatprep.subr.mxu0 0.0
    %v1264 = vand.u32 %v118, 4294901760
    %v1265 = vsub.f32 %v118, %v1264
    %v1266 = vand.u32 %v1265, 4294901760
    %v1267 = vsub.f32 %v1265, %v1266
    %v1268 = vand.u32 %v1267, 4294901760
    %1269 = vmatpush1.msra.mxu0 %v1268
    %1270 = vmatprep.subr.mxu0 0.0
    %v1271 = vand.u32 %v119, 4294901760
    %v1272 = vsub.f32 %v119, %v1271
    %v1273 = vand.u32 %v1272, 4294901760
    %v1274 = vsub.f32 %v1272, %v1273
    %v1275 = vand.u32 %v1274, 4294901760
    %1276 = vmatpush1.msra.mxu0 %v1275
    %1277 = vmatprep.subr.mxu0 0.0
    %v1278 = vand.u32 %v120, 4294901760
    %v1279 = vsub.f32 %v120, %v1278
    %v1280 = vand.u32 %v1279, 4294901760
    %v1281 = vsub.f32 %v1279, %v1280
    %v1282 = vand.u32 %v1281, 4294901760
    %1283 = vmatpush1.msra.mxu0 %v1282
    %1284 = vmatprep.subr.mxu0 0.0
    %v1285 = vand.u32 %v121, 4294901760
    %v1286 = vsub.f32 %v121, %v1285
    %v1287 = vand.u32 %v1286, 4294901760
    %v1288 = vsub.f32 %v1286, %v1287
    %v1289 = vand.u32 %v1288, 4294901760
    %1290 = vmatpush1.msra.mxu0 %v1289
    %1291 = vmatprep.subr.mxu0 0.0
    %v1292 = vand.u32 %v122, 4294901760
    %v1293 = vsub.f32 %v122, %v1292
    %v1294 = vand.u32 %v1293, 4294901760
    %v1295 = vsub.f32 %v1293, %v1294
    %v1296 = vand.u32 %v1295, 4294901760
    %1297 = vmatpush1.msra.mxu0 %v1296
    %1298 = vmatprep.subr.mxu0 0.0
    %v1299 = vand.u32 %v123, 4294901760
    %v1300 = vsub.f32 %v123, %v1299
    %v1301 = vand.u32 %v1300, 4294901760
    %v1302 = vsub.f32 %v1300, %v1301
    %v1303 = vand.u32 %v1302, 4294901760
    %1304 = vmatpush1.msra.mxu0 %v1303
    %1305 = vmatprep.subr.mxu0 0.0
    %v1306 = vand.u32 %v124, 4294901760
    %v1307 = vsub.f32 %v124, %v1306
    %v1308 = vand.u32 %v1307, 4294901760
    %v1309 = vsub.f32 %v1307, %v1308
    %v1310 = vand.u32 %v1309, 4294901760
    %1311 = vmatpush1.msra.mxu0 %v1310
    %1312 = vmatprep.subr.mxu0 0.0
    %v1313 = vand.u32 %v125, 4294901760
    %v1314 = vsub.f32 %v125, %v1313
    %v1315 = vand.u32 %v1314, 4294901760
    %v1316 = vsub.f32 %v1314, %v1315
    %v1317 = vand.u32 %v1316, 4294901760
    %1318 = vmatpush1.msra.mxu0 %v1317
    %1319 = vmatprep.subr.mxu0 0.0
    %v1320 = vand.u32 %v126, 4294901760
    %v1321 = vsub.f32 %v126, %v1320
    %v1322 = vand.u32 %v1321, 4294901760
    %v1323 = vsub.f32 %v1321, %v1322
    %v1324 = vand.u32 %v1323, 4294901760
    %1325 = vmatpush1.msra.mxu0 %v1324
    %1326 = vmatprep.subr.mxu0 0.0
    %v1327 = vand.u32 %v127, 4294901760
    %v1328 = vsub.f32 %v127, %v1327
    %v1329 = vand.u32 %v1328, 4294901760
    %v1330 = vsub.f32 %v1328, %v1329
    %v1331 = vand.u32 %v1330, 4294901760
    %1332 = vmatpush1.msra.mxu0 %v1331
    %v1333 = vand.u32 %v63, 4294901760
    %1334 = vmatprep.mubr.f32.mxu0 %v1333
    %v1335 = vand.u32 %v62, 4294901760
    %1336 = vmatmul.mubr.f32.gmra.mrb[0].mxu0 %v1335
    %v1337 = vpop.f32.mrb[0].mxu0
    %v1338 = vadd.f32 %v1106, %v1337
    %v1339 = vpop.f32.mrb[0].mxu0
    %1340 = vdwg.mxu0
    %1341 = vmatprep.subr.mxu0 0.0
    %v1342 = vand.u32 %v96, 4294901760
    %v1343 = vsub.f32 %v96, %v1342
    %1344 = vmatpush1.msra.mxu0 %v1343
    %1345 = vmatprep.subr.mxu0 0.0
    %v1346 = vand.u32 %v97, 4294901760
    %v1347 = vsub.f32 %v97, %v1346
    %1348 = vmatpush1.msra.mxu0 %v1347
    %1349 = vmatprep.subr.mxu0 0.0
    %v1350 = vand.u32 %v98, 4294901760
    %v1351 = vsub.f32 %v98, %v1350
    %1352 = vmatpush1.msra.mxu0 %v1351
    %1353 = vmatprep.subr.mxu0 0.0
    %v1354 = vand.u32 %v99, 4294901760
    %v1355 = vsub.f32 %v99, %v1354
    %1356 = vmatpush1.msra.mxu0 %v1355
    %1357 = vmatprep.subr.mxu0 0.0
    %v1358 = vand.u32 %v100, 4294901760
    %v1359 = vsub.f32 %v100, %v1358
    %1360 = vmatpush1.msra.mxu0 %v1359
    %1361 = vmatprep.subr.mxu0 0.0
    %v1362 = vand.u32 %v101, 4294901760
    %v1363 = vsub.f32 %v101, %v1362
    %1364 = vmatpush1.msra.mxu0 %v1363
    %1365 = vmatprep.subr.mxu0 0.0
    %v1366 = vand.u32 %v102, 4294901760
    %v1367 = vsub.f32 %v102, %v1366
    %1368 = vmatpush1.msra.mxu0 %v1367
    %1369 = vmatprep.subr.mxu0 0.0
    %v1370 = vand.u32 %v103, 4294901760
    %v1371 = vsub.f32 %v103, %v1370
    %1372 = vmatpush1.msra.mxu0 %v1371
    %1373 = vmatprep.subr.mxu0 0.0
    %v1374 = vand.u32 %v104, 4294901760
    %v1375 = vsub.f32 %v104, %v1374
    %1376 = vmatpush1.msra.mxu0 %v1375
    %1377 = vmatprep.subr.mxu0 0.0
    %v1378 = vand.u32 %v105, 4294901760
    %v1379 = vsub.f32 %v105, %v1378
    %1380 = vmatpush1.msra.mxu0 %v1379
    %1381 = vmatprep.subr.mxu0 0.0
    %v1382 = vand.u32 %v106, 4294901760
    %v1383 = vsub.f32 %v106, %v1382
    %1384 = vmatpush1.msra.mxu0 %v1383
    %1385 = vmatprep.subr.mxu0 0.0
    %v1386 = vand.u32 %v107, 4294901760
    %v1387 = vsub.f32 %v107, %v1386
    %1388 = vmatpush1.msra.mxu0 %v1387
    %1389 = vmatprep.subr.mxu0 0.0
    %v1390 = vand.u32 %v108, 4294901760
    %v1391 = vsub.f32 %v108, %v1390
    %1392 = vmatpush1.msra.mxu0 %v1391
    %1393 = vmatprep.subr.mxu0 0.0
    %v1394 = vand.u32 %v109, 4294901760
    %v1395 = vsub.f32 %v109, %v1394
    %1396 = vmatpush1.msra.mxu0 %v1395
    %1397 = vmatprep.subr.mxu0 0.0
    %v1398 = vand.u32 %v110, 4294901760
    %v1399 = vsub.f32 %v110, %v1398
    %1400 = vmatpush1.msra.mxu0 %v1399
    %1401 = vmatprep.subr.mxu0 0.0
    %v1402 = vand.u32 %v111, 4294901760
    %v1403 = vsub.f32 %v111, %v1402
    %1404 = vmatpush1.msra.mxu0 %v1403
    %1405 = vmatprep.subr.mxu0 0.0
    %v1406 = vand.u32 %v112, 4294901760
    %v1407 = vsub.f32 %v112, %v1406
    %1408 = vmatpush1.msra.mxu0 %v1407
    %1409 = vmatprep.subr.mxu0 0.0
    %v1410 = vand.u32 %v113, 4294901760
    %v1411 = vsub.f32 %v113, %v1410
    %1412 = vmatpush1.msra.mxu0 %v1411
    %1413 = vmatprep.subr.mxu0 0.0
    %v1414 = vand.u32 %v114, 4294901760
    %v1415 = vsub.f32 %v114, %v1414
    %1416 = vmatpush1.msra.mxu0 %v1415
    %1417 = vmatprep.subr.mxu0 0.0
    %v1418 = vand.u32 %v115, 4294901760
    %v1419 = vsub.f32 %v115, %v1418
    %1420 = vmatpush1.msra.mxu0 %v1419
    %1421 = vmatprep.subr.mxu0 0.0
    %v1422 = vand.u32 %v116, 4294901760
    %v1423 = vsub.f32 %v116, %v1422
    %1424 = vmatpush1.msra.mxu0 %v1423
    %1425 = vmatprep.subr.mxu0 0.0
    %v1426 = vand.u32 %v117, 4294901760
    %v1427 = vsub.f32 %v117, %v1426
    %1428 = vmatpush1.msra.mxu0 %v1427
    %1429 = vmatprep.subr.mxu0 0.0
    %v1430 = vand.u32 %v118, 4294901760
    %v1431 = vsub.f32 %v118, %v1430
    %1432 = vmatpush1.msra.mxu0 %v1431
    %1433 = vmatprep.subr.mxu0 0.0
    %v1434 = vand.u32 %v119, 4294901760
    %v1435 = vsub.f32 %v119, %v1434
    %1436 = vmatpush1.msra.mxu0 %v1435
    %1437 = vmatprep.subr.mxu0 0.0
    %v1438 = vand.u32 %v120, 4294901760
    %v1439 = vsub.f32 %v120, %v1438
    %1440 = vmatpush1.msra.mxu0 %v1439
    %1441 = vmatprep.subr.mxu0 0.0
    %v1442 = vand.u32 %v121, 4294901760
    %v1443 = vsub.f32 %v121, %v1442
    %1444 = vmatpush1.msra.mxu0 %v1443
    %1445 = vmatprep.subr.mxu0 0.0
    %v1446 = vand.u32 %v122, 4294901760
    %v1447 = vsub.f32 %v122, %v1446
    %1448 = vmatpush1.msra.mxu0 %v1447
    %1449 = vmatprep.subr.mxu0 0.0
    %v1450 = vand.u32 %v123, 4294901760
    %v1451 = vsub.f32 %v123, %v1450
    %1452 = vmatpush1.msra.mxu0 %v1451
    %1453 = vmatprep.subr.mxu0 0.0
    %v1454 = vand.u32 %v124, 4294901760
    %v1455 = vsub.f32 %v124, %v1454
    %1456 = vmatpush1.msra.mxu0 %v1455
    %1457 = vmatprep.subr.mxu0 0.0
    %v1458 = vand.u32 %v125, 4294901760
    %v1459 = vsub.f32 %v125, %v1458
    %1460 = vmatpush1.msra.mxu0 %v1459
    %1461 = vmatprep.subr.mxu0 0.0
    %v1462 = vand.u32 %v126, 4294901760
    %v1463 = vsub.f32 %v126, %v1462
    %1464 = vmatpush1.msra.mxu0 %v1463
    %1465 = vmatprep.subr.mxu0 0.0
    %v1466 = vand.u32 %v127, 4294901760
    %v1467 = vsub.f32 %v127, %v1466
    %1468 = vmatpush1.msra.mxu0 %v1467
    %v1469 = vand.u32 %v63, 4294901760
    %v1470 = vsub.f32 %v63, %v1469
    %1471 = vmatprep.mubr.f32.mxu0 %v1470
    %v1472 = vand.u32 %v62, 4294901760
    %v1473 = vsub.f32 %v62, %v1472
    %1474 = vmatmul.mubr.f32.gmra.mrb[0].mxu0 %v1473
    %v1475 = vpop.f32.mrb[0].mxu0
    %v1476 = vadd.f32 %v1338, %v1475
    %v1477 = vpop.f32.mrb[0].mxu0
    %1478 = vdwg.mxu0
    %1479 = vmatprep.subr.mxu0 0.0
    %v1480 = vand.u32 %v96, 4294901760
    %1481 = vmatpush1.msra.mxu0 %v1480
    %1482 = vmatprep.subr.mxu0 0.0
    %v1483 = vand.u32 %v97, 4294901760
    %1484 = vmatpush1.msra.mxu0 %v1483
    %1485 = vmatprep.subr.mxu0 0.0
    %v1486 = vand.u32 %v98, 4294901760
    %1487 = vmatpush1.msra.mxu0 %v1486
    %1488 = vmatprep.subr.mxu0 0.0
    %v1489 = vand.u32 %v99, 4294901760
    %1490 = vmatpush1.msra.mxu0 %v1489
    %1491 = vmatprep.subr.mxu0 0.0
    %v1492 = vand.u32 %v100, 4294901760
    %1493 = vmatpush1.msra.mxu0 %v1492
    %1494 = vmatprep.subr.mxu0 0.0
    %v1495 = vand.u32 %v101, 4294901760
    %1496 = vmatpush1.msra.mxu0 %v1495
    %1497 = vmatprep.subr.mxu0 0.0
    %v1498 = vand.u32 %v102, 4294901760
    %1499 = vmatpush1.msra.mxu0 %v1498
    %1500 = vmatprep.subr.mxu0 0.0
    %v1501 = vand.u32 %v103, 4294901760
    %1502 = vmatpush1.msra.mxu0 %v1501
    %1503 = vmatprep.subr.mxu0 0.0
    %v1504 = vand.u32 %v104, 4294901760
    %1505 = vmatpush1.msra.mxu0 %v1504
    %1506 = vmatprep.subr.mxu0 0.0
    %v1507 = vand.u32 %v105, 4294901760
    %1508 = vmatpush1.msra.mxu0 %v1507
    %1509 = vmatprep.subr.mxu0 0.0
    %v1510 = vand.u32 %v106, 4294901760
    %1511 = vmatpush1.msra.mxu0 %v1510
    %1512 = vmatprep.subr.mxu0 0.0
    %v1513 = vand.u32 %v107, 4294901760
    %1514 = vmatpush1.msra.mxu0 %v1513
    %1515 = vmatprep.subr.mxu0 0.0
    %v1516 = vand.u32 %v108, 4294901760
    %1517 = vmatpush1.msra.mxu0 %v1516
    %1518 = vmatprep.subr.mxu0 0.0
    %v1519 = vand.u32 %v109, 4294901760
    %1520 = vmatpush1.msra.mxu0 %v1519
    %1521 = vmatprep.subr.mxu0 0.0
    %v1522 = vand.u32 %v110, 4294901760
    %1523 = vmatpush1.msra.mxu0 %v1522
    %1524 = vmatprep.subr.mxu0 0.0
    %v1525 = vand.u32 %v111, 4294901760
    %1526 = vmatpush1.msra.mxu0 %v1525
    %1527 = vmatprep.subr.mxu0 0.0
    %v1528 = vand.u32 %v112, 4294901760
    %1529 = vmatpush1.msra.mxu0 %v1528
    %1530 = vmatprep.subr.mxu0 0.0
    %v1531 = vand.u32 %v113, 4294901760
    %1532 = vmatpush1.msra.mxu0 %v1531
    %1533 = vmatprep.subr.mxu0 0.0
    %v1534 = vand.u32 %v114, 4294901760
    %1535 = vmatpush1.msra.mxu0 %v1534
    %1536 = vmatprep.subr.mxu0 0.0
    %v1537 = vand.u32 %v115, 4294901760
    %1538 = vmatpush1.msra.mxu0 %v1537
    %1539 = vmatprep.subr.mxu0 0.0
    %v1540 = vand.u32 %v116, 4294901760
    %1541 = vmatpush1.msra.mxu0 %v1540
    %1542 = vmatprep.subr.mxu0 0.0
    %v1543 = vand.u32 %v117, 4294901760
    %1544 = vmatpush1.msra.mxu0 %v1543
    %1545 = vmatprep.subr.mxu0 0.0
    %v1546 = vand.u32 %v118, 4294901760
    %1547 = vmatpush1.msra.mxu0 %v1546
    %1548 = vmatprep.subr.mxu0 0.0
    %v1549 = vand.u32 %v119, 4294901760
    %1550 = vmatpush1.msra.mxu0 %v1549
    %1551 = vmatprep.subr.mxu0 0.0
    %v1552 = vand.u32 %v120, 4294901760
    %1553 = vmatpush1.msra.mxu0 %v1552
    %1554 = vmatprep.subr.mxu0 0.0
    %v1555 = vand.u32 %v121, 4294901760
    %1556 = vmatpush1.msra.mxu0 %v1555
    %1557 = vmatprep.subr.mxu0 0.0
    %v1558 = vand.u32 %v122, 4294901760
    %1559 = vmatpush1.msra.mxu0 %v1558
    %1560 = vmatprep.subr.mxu0 0.0
    %v1561 = vand.u32 %v123, 4294901760
    %1562 = vmatpush1.msra.mxu0 %v1561
    %1563 = vmatprep.subr.mxu0 0.0
    %v1564 = vand.u32 %v124, 4294901760
    %1565 = vmatpush1.msra.mxu0 %v1564
    %1566 = vmatprep.subr.mxu0 0.0
    %v1567 = vand.u32 %v125, 4294901760
    %1568 = vmatpush1.msra.mxu0 %v1567
    %1569 = vmatprep.subr.mxu0 0.0
    %v1570 = vand.u32 %v126, 4294901760
    %1571 = vmatpush1.msra.mxu0 %v1570
    %1572 = vmatprep.subr.mxu0 0.0
    %v1573 = vand.u32 %v127, 4294901760
    %1574 = vmatpush1.msra.mxu0 %v1573
    %v1575 = vand.u32 %v63, 4294901760
    %v1576 = vsub.f32 %v63, %v1575
    %v1577 = vand.u32 %v1576, 4294901760
    %1578 = vmatprep.mubr.f32.mxu0 %v1577
    %v1579 = vand.u32 %v62, 4294901760
    %v1580 = vsub.f32 %v62, %v1579
    %v1581 = vand.u32 %v1580, 4294901760
    %1582 = vmatmul.mubr.f32.gmra.mrb[0].mxu0 %v1581
    %v1583 = vpop.f32.mrb[0].mxu0
    %v1584 = vadd.f32 %v1476, %v1583
    %v1585 = vpop.f32.mrb[0].mxu0
    %1586 = vdwg.mxu0
    %1587 = vmatprep.subr.mxu0 0.0
    %v1588 = vand.u32 %v96, 4294901760
    %v1589 = vsub.f32 %v96, %v1588
    %v1590 = vand.u32 %v1589, 4294901760
    %1591 = vmatpush1.msra.mxu0 %v1590
    %1592 = vmatprep.subr.mxu0 0.0
    %v1593 = vand.u32 %v97, 4294901760
    %v1594 = vsub.f32 %v97, %v1593
    %v1595 = vand.u32 %v1594, 4294901760
    %1596 = vmatpush1.msra.mxu0 %v1595
    %1597 = vmatprep.subr.mxu0 0.0
    %v1598 = vand.u32 %v98, 4294901760
    %v1599 = vsub.f32 %v98, %v1598
    %v1600 = vand.u32 %v1599, 4294901760
    %1601 = vmatpush1.msra.mxu0 %v1600
    %1602 = vmatprep.subr.mxu0 0.0
    %v1603 = vand.u32 %v99, 4294901760
    %v1604 = vsub.f32 %v99, %v1603
    %v1605 = vand.u32 %v1604, 4294901760
    %1606 = vmatpush1.msra.mxu0 %v1605
    %1607 = vmatprep.subr.mxu0 0.0
    %v1608 = vand.u32 %v100, 4294901760
    %v1609 = vsub.f32 %v100, %v1608
    %v1610 = vand.u32 %v1609, 4294901760
    %1611 = vmatpush1.msra.mxu0 %v1610
    %1612 = vmatprep.subr.mxu0 0.0
    %v1613 = vand.u32 %v101, 4294901760
    %v1614 = vsub.f32 %v101, %v1613
    %v1615 = vand.u32 %v1614, 4294901760
    %1616 = vmatpush1.msra.mxu0 %v1615
    %1617 = vmatprep.subr.mxu0 0.0
    %v1618 = vand.u32 %v102, 4294901760
    %v1619 = vsub.f32 %v102, %v1618
    %v1620 = vand.u32 %v1619, 4294901760
    %1621 = vmatpush1.msra.mxu0 %v1620
    %1622 = vmatprep.subr.mxu0 0.0
    %v1623 = vand.u32 %v103, 4294901760
    %v1624 = vsub.f32 %v103, %v1623
    %v1625 = vand.u32 %v1624, 4294901760
    %1626 = vmatpush1.msra.mxu0 %v1625
    %1627 = vmatprep.subr.mxu0 0.0
    %v1628 = vand.u32 %v104, 4294901760
    %v1629 = vsub.f32 %v104, %v1628
    %v1630 = vand.u32 %v1629, 4294901760
    %1631 = vmatpush1.msra.mxu0 %v1630
    %1632 = vmatprep.subr.mxu0 0.0
    %v1633 = vand.u32 %v105, 4294901760
    %v1634 = vsub.f32 %v105, %v1633
    %v1635 = vand.u32 %v1634, 4294901760
    %1636 = vmatpush1.msra.mxu0 %v1635
    %1637 = vmatprep.subr.mxu0 0.0
    %v1638 = vand.u32 %v106, 4294901760
    %v1639 = vsub.f32 %v106, %v1638
    %v1640 = vand.u32 %v1639, 4294901760
    %1641 = vmatpush1.msra.mxu0 %v1640
    %1642 = vmatprep.subr.mxu0 0.0
    %v1643 = vand.u32 %v107, 4294901760
    %v1644 = vsub.f32 %v107, %v1643
    %v1645 = vand.u32 %v1644, 4294901760
    %1646 = vmatpush1.msra.mxu0 %v1645
    %1647 = vmatprep.subr.mxu0 0.0
    %v1648 = vand.u32 %v108, 4294901760
    %v1649 = vsub.f32 %v108, %v1648
    %v1650 = vand.u32 %v1649, 4294901760
    %1651 = vmatpush1.msra.mxu0 %v1650
    %1652 = vmatprep.subr.mxu0 0.0
    %v1653 = vand.u32 %v109, 4294901760
    %v1654 = vsub.f32 %v109, %v1653
    %v1655 = vand.u32 %v1654, 4294901760
    %1656 = vmatpush1.msra.mxu0 %v1655
    %1657 = vmatprep.subr.mxu0 0.0
    %v1658 = vand.u32 %v110, 4294901760
    %v1659 = vsub.f32 %v110, %v1658
    %v1660 = vand.u32 %v1659, 4294901760
    %1661 = vmatpush1.msra.mxu0 %v1660
    %1662 = vmatprep.subr.mxu0 0.0
    %v1663 = vand.u32 %v111, 4294901760
    %v1664 = vsub.f32 %v111, %v1663
    %v1665 = vand.u32 %v1664, 4294901760
    %1666 = vmatpush1.msra.mxu0 %v1665
    %1667 = vmatprep.subr.mxu0 0.0
    %v1668 = vand.u32 %v112, 4294901760
    %v1669 = vsub.f32 %v112, %v1668
    %v1670 = vand.u32 %v1669, 4294901760
    %1671 = vmatpush1.msra.mxu0 %v1670
    %1672 = vmatprep.subr.mxu0 0.0
    %v1673 = vand.u32 %v113, 4294901760
    %v1674 = vsub.f32 %v113, %v1673
    %v1675 = vand.u32 %v1674, 4294901760
    %1676 = vmatpush1.msra.mxu0 %v1675
    %1677 = vmatprep.subr.mxu0 0.0
    %v1678 = vand.u32 %v114, 4294901760
    %v1679 = vsub.f32 %v114, %v1678
    %v1680 = vand.u32 %v1679, 4294901760
    %1681 = vmatpush1.msra.mxu0 %v1680
    %1682 = vmatprep.subr.mxu0 0.0
    %v1683 = vand.u32 %v115, 4294901760
    %v1684 = vsub.f32 %v115, %v1683
    %v1685 = vand.u32 %v1684, 4294901760
    %1686 = vmatpush1.msra.mxu0 %v1685
    %1687 = vmatprep.subr.mxu0 0.0
    %v1688 = vand.u32 %v116, 4294901760
    %v1689 = vsub.f32 %v116, %v1688
    %v1690 = vand.u32 %v1689, 4294901760
    %1691 = vmatpush1.msra.mxu0 %v1690
    %1692 = vmatprep.subr.mxu0 0.0
    %v1693 = vand.u32 %v117, 4294901760
    %v1694 = vsub.f32 %v117, %v1693
    %v1695 = vand.u32 %v1694, 4294901760
    %1696 = vmatpush1.msra.mxu0 %v1695
    %1697 = vmatprep.subr.mxu0 0.0
    %v1698 = vand.u32 %v118, 4294901760
    %v1699 = vsub.f32 %v118, %v1698
    %v1700 = vand.u32 %v1699, 4294901760
    %1701 = vmatpush1.msra.mxu0 %v1700
    %1702 = vmatprep.subr.mxu0 0.0
    %v1703 = vand.u32 %v119, 4294901760
    %v1704 = vsub.f32 %v119, %v1703
    %v1705 = vand.u32 %v1704, 4294901760
    %1706 = vmatpush1.msra.mxu0 %v1705
    %1707 = vmatprep.subr.mxu0 0.0
    %v1708 = vand.u32 %v120, 4294901760
    %v1709 = vsub.f32 %v120, %v1708
    %v1710 = vand.u32 %v1709, 4294901760
    %1711 = vmatpush1.msra.mxu0 %v1710
    %1712 = vmatprep.subr.mxu0 0.0
    %v1713 = vand.u32 %v121, 4294901760
    %v1714 = vsub.f32 %v121, %v1713
    %v1715 = vand.u32 %v1714, 4294901760
    %1716 = vmatpush1.msra.mxu0 %v1715
    %1717 = vmatprep.subr.mxu0 0.0
    %v1718 = vand.u32 %v122, 4294901760
    %v1719 = vsub.f32 %v122, %v1718
    %v1720 = vand.u32 %v1719, 4294901760
    %1721 = vmatpush1.msra.mxu0 %v1720
    %1722 = vmatprep.subr.mxu0 0.0
    %v1723 = vand.u32 %v123, 4294901760
    %v1724 = vsub.f32 %v123, %v1723
    %v1725 = vand.u32 %v1724, 4294901760
    %1726 = vmatpush1.msra.mxu0 %v1725
    %1727 = vmatprep.subr.mxu0 0.0
    %v1728 = vand.u32 %v124, 4294901760
    %v1729 = vsub.f32 %v124, %v1728
    %v1730 = vand.u32 %v1729, 4294901760
    %1731 = vmatpush1.msra.mxu0 %v1730
    %1732 = vmatprep.subr.mxu0 0.0
    %v1733 = vand.u32 %v125, 4294901760
    %v1734 = vsub.f32 %v125, %v1733
    %v1735 = vand.u32 %v1734, 4294901760
    %1736 = vmatpush1.msra.mxu0 %v1735
    %1737 = vmatprep.subr.mxu0 0.0
    %v1738 = vand.u32 %v126, 4294901760
    %v1739 = vsub.f32 %v126, %v1738
    %v1740 = vand.u32 %v1739, 4294901760
    %1741 = vmatpush1.msra.mxu0 %v1740
    %1742 = vmatprep.subr.mxu0 0.0
    %v1743 = vand.u32 %v127, 4294901760
    %v1744 = vsub.f32 %v127, %v1743
    %v1745 = vand.u32 %v1744, 4294901760
    %1746 = vmatpush1.msra.mxu0 %v1745
    %v1747 = vand.u32 %v63, 4294901760
    %1748 = vmatprep.mubr.f32.mxu0 %v1747
    %v1749 = vand.u32 %v62, 4294901760
    %1750 = vmatmul.mubr.f32.gmra.mrb[0].mxu0 %v1749
    %v1751 = vpop.f32.mrb[0].mxu0
    %v1752 = vadd.f32 %v1584, %v1751
    %v1753 = vpop.f32.mrb[0].mxu0
    %1754 = vdwg.mxu0
    %1755 = vmatprep.subr.mxu0 0.0
    %v1756 = vand.u32 %v96, 4294901760
    %1757 = vmatpush1.msra.mxu0 %v1756
    %1758 = vmatprep.subr.mxu0 0.0
    %v1759 = vand.u32 %v97, 4294901760
    %1760 = vmatpush1.msra.mxu0 %v1759
    %1761 = vmatprep.subr.mxu0 0.0
    %v1762 = vand.u32 %v98, 4294901760
    %1763 = vmatpush1.msra.mxu0 %v1762
    %1764 = vmatprep.subr.mxu0 0.0
    %v1765 = vand.u32 %v99, 4294901760
    %1766 = vmatpush1.msra.mxu0 %v1765
    %1767 = vmatprep.subr.mxu0 0.0
    %v1768 = vand.u32 %v100, 4294901760
    %1769 = vmatpush1.msra.mxu0 %v1768
    %1770 = vmatprep.subr.mxu0 0.0
    %v1771 = vand.u32 %v101, 4294901760
    %1772 = vmatpush1.msra.mxu0 %v1771
    %1773 = vmatprep.subr.mxu0 0.0
    %v1774 = vand.u32 %v102, 4294901760
    %1775 = vmatpush1.msra.mxu0 %v1774
    %1776 = vmatprep.subr.mxu0 0.0
    %v1777 = vand.u32 %v103, 4294901760
    %1778 = vmatpush1.msra.mxu0 %v1777
    %1779 = vmatprep.subr.mxu0 0.0
    %v1780 = vand.u32 %v104, 4294901760
    %1781 = vmatpush1.msra.mxu0 %v1780
    %1782 = vmatprep.subr.mxu0 0.0
    %v1783 = vand.u32 %v105, 4294901760
    %1784 = vmatpush1.msra.mxu0 %v1783
    %1785 = vmatprep.subr.mxu0 0.0
    %v1786 = vand.u32 %v106, 4294901760
    %1787 = vmatpush1.msra.mxu0 %v1786
    %1788 = vmatprep.subr.mxu0 0.0
    %v1789 = vand.u32 %v107, 4294901760
    %1790 = vmatpush1.msra.mxu0 %v1789
    %1791 = vmatprep.subr.mxu0 0.0
    %v1792 = vand.u32 %v108, 4294901760
    %1793 = vmatpush1.msra.mxu0 %v1792
    %1794 = vmatprep.subr.mxu0 0.0
    %v1795 = vand.u32 %v109, 4294901760
    %1796 = vmatpush1.msra.mxu0 %v1795
    %1797 = vmatprep.subr.mxu0 0.0
    %v1798 = vand.u32 %v110, 4294901760
    %1799 = vmatpush1.msra.mxu0 %v1798
    %1800 = vmatprep.subr.mxu0 0.0
    %v1801 = vand.u32 %v111, 4294901760
    %1802 = vmatpush1.msra.mxu0 %v1801
    %1803 = vmatprep.subr.mxu0 0.0
    %v1804 = vand.u32 %v112, 4294901760
    %1805 = vmatpush1.msra.mxu0 %v1804
    %1806 = vmatprep.subr.mxu0 0.0
    %v1807 = vand.u32 %v113, 4294901760
    %1808 = vmatpush1.msra.mxu0 %v1807
    %1809 = vmatprep.subr.mxu0 0.0
    %v1810 = vand.u32 %v114, 4294901760
    %1811 = vmatpush1.msra.mxu0 %v1810
    %1812 = vmatprep.subr.mxu0 0.0
    %v1813 = vand.u32 %v115, 4294901760
    %1814 = vmatpush1.msra.mxu0 %v1813
    %1815 = vmatprep.subr.mxu0 0.0
    %v1816 = vand.u32 %v116, 4294901760
    %1817 = vmatpush1.msra.mxu0 %v1816
    %1818 = vmatprep.subr.mxu0 0.0
    %v1819 = vand.u32 %v117, 4294901760
    %1820 = vmatpush1.msra.mxu0 %v1819
    %1821 = vmatprep.subr.mxu0 0.0
    %v1822 = vand.u32 %v118, 4294901760
    %1823 = vmatpush1.msra.mxu0 %v1822
    %1824 = vmatprep.subr.mxu0 0.0
    %v1825 = vand.u32 %v119, 4294901760
    %1826 = vmatpush1.msra.mxu0 %v1825
    %1827 = vmatprep.subr.mxu0 0.0
    %v1828 = vand.u32 %v120, 4294901760
    %1829 = vmatpush1.msra.mxu0 %v1828
    %1830 = vmatprep.subr.mxu0 0.0
    %v1831 = vand.u32 %v121, 4294901760
    %1832 = vmatpush1.msra.mxu0 %v1831
    %1833 = vmatprep.subr.mxu0 0.0
    %v1834 = vand.u32 %v122, 4294901760
    %1835 = vmatpush1.msra.mxu0 %v1834
    %1836 = vmatprep.subr.mxu0 0.0
    %v1837 = vand.u32 %v123, 4294901760
    %1838 = vmatpush1.msra.mxu0 %v1837
    %1839 = vmatprep.subr.mxu0 0.0
    %v1840 = vand.u32 %v124, 4294901760
    %1841 = vmatpush1.msra.mxu0 %v1840
    %1842 = vmatprep.subr.mxu0 0.0
    %v1843 = vand.u32 %v125, 4294901760
    %1844 = vmatpush1.msra.mxu0 %v1843
    %1845 = vmatprep.subr.mxu0 0.0
    %v1846 = vand.u32 %v126, 4294901760
    %1847 = vmatpush1.msra.mxu0 %v1846
    %1848 = vmatprep.subr.mxu0 0.0
    %v1849 = vand.u32 %v127, 4294901760
    %1850 = vmatpush1.msra.mxu0 %v1849
    %v1851 = vand.u32 %v63, 4294901760
    %1852 = vmatprep.mubr.f32.mxu0 %v1851
    %v1853 = vand.u32 %v62, 4294901760
    %1854 = vmatmul.mubr.f32.gmra.mrb[0].mxu0 %v1853
    %v1855 = vpop.f32.mrb[0].mxu0
    %v1856 = vadd.f32 %v1752, %v1855
    %v1857 = vpop.f32.mrb[0].mxu0
    %1858 = vdwg.mxu0
    %v1859 = vmax.f32 %v1856, 0.0
    %v1860 = vld [vmem:[#allocation7] sm:$0xff]
    %v1861 = vld [vmem:[#allocation7 + $0x8] sm:$0xff]
    %v1862 = vld [vmem:[#allocation7 + $0x10] sm:$0xff]
    %v1863 = vld [vmem:[#allocation7 + $0x18] sm:$0xff]
    %v1864 = vld [vmem:[#allocation7 + $0x20] sm:$0xff]
    %v1865 = vld [vmem:[#allocation7 + $0x28] sm:$0xff]
    %v1866 = vld [vmem:[#allocation7 + $0x30] sm:$0xff]
    %v1867 = vld [vmem:[#allocation7 + $0x38] sm:$0xff]
    %v1868 = vld [vmem:[#allocation7 + $0x40] sm:$0xff]
    %v1869 = vld [vmem:[#allocation7 + $0x48] sm:$0xff]
    %v1870 = vld [vmem:[#allocation7 + $0x50] sm:$0xff]
    %v1871 = vld [vmem:[#allocation7 + $0x58] sm:$0xff]
    %v1872 = vld [vmem:[#allocation7 + $0x60] sm:$0xff]
    %v1873 = vld [vmem:[#allocation7 + $0x68] sm:$0xff]
    %v1874 = vld [vmem:[#allocation7 + $0x70] sm:$0xff]
    %v1875 = vld [vmem:[#allocation7 + $0x78] sm:$0xff]
    %v1876 = vld [vmem:[%s4] sm:$0x1]
    %v1878 = vlaneseq
    %v1879 = vshrl.u32 %v1878, 7
    %v1880 = vsub.s32 0, %v1879
    %v1881 = vrot.slane %v1876, %v1880
    %1883 = vmatprep.subr.mxu0 0.0
    %v1884 = vand.u32 %v1860, 4294901760
    %1885 = vmatpush1.msra.mxu0 %v1884
    %1886 = vmatprep.subr.mxu0 0.0
    %v1887 = vand.u32 %v1861, 4294901760
    %1888 = vmatpush1.msra.mxu0 %v1887
    %1889 = vmatprep.subr.mxu0 0.0
    %v1890 = vand.u32 %v1862, 4294901760
    %1891 = vmatpush1.msra.mxu0 %v1890
    %1892 = vmatprep.subr.mxu0 0.0
    %v1893 = vand.u32 %v1863, 4294901760
    %1894 = vmatpush1.msra.mxu0 %v1893
    %1895 = vmatprep.subr.mxu0 0.0
    %v1896 = vand.u32 %v1864, 4294901760
    %1897 = vmatpush1.msra.mxu0 %v1896
    %1898 = vmatprep.subr.mxu0 0.0
    %v1899 = vand.u32 %v1865, 4294901760
    %1900 = vmatpush1.msra.mxu0 %v1899
    %1901 = vmatprep.subr.mxu0 0.0
    %v1902 = vand.u32 %v1866, 4294901760
    %1903 = vmatpush1.msra.mxu0 %v1902
    %1904 = vmatprep.subr.mxu0 0.0
    %v1905 = vand.u32 %v1867, 4294901760
    %1906 = vmatpush1.msra.mxu0 %v1905
    %1907 = vmatprep.subr.mxu0 0.0
    %v1908 = vand.u32 %v1868, 4294901760
    %1909 = vmatpush1.msra.mxu0 %v1908
    %1910 = vmatprep.subr.mxu0 0.0
    %v1911 = vand.u32 %v1869, 4294901760
    %1912 = vmatpush1.msra.mxu0 %v1911
    %1913 = vmatprep.subr.mxu0 0.0
    %v1914 = vand.u32 %v1870, 4294901760
    %1915 = vmatpush1.msra.mxu0 %v1914
    %1916 = vmatprep.subr.mxu0 0.0
    %v1917 = vand.u32 %v1871, 4294901760
    %1918 = vmatpush1.msra.mxu0 %v1917
    %1919 = vmatprep.subr.mxu0 0.0
    %v1920 = vand.u32 %v1872, 4294901760
    %1921 = vmatpush1.msra.mxu0 %v1920
    %1922 = vmatprep.subr.mxu0 0.0
    %v1923 = vand.u32 %v1873, 4294901760
    %1924 = vmatpush1.msra.mxu0 %v1923
    %1925 = vmatprep.subr.mxu0 0.0
    %v1926 = vand.u32 %v1874, 4294901760
    %1927 = vmatpush1.msra.mxu0 %v1926
    %1928 = vmatprep.subr.mxu0 0.0
    %v1929 = vand.u32 %v1875, 4294901760
    %1930 = vmatpush1.msra.mxu0 %v1929
    %1931 = vmatprep.subr.mxu0 0.0
    %1932 = vmatpush1.msra.mxu0 0.0
    %1933 = vmatprep.subr.mxu0 0.0
    %1934 = vmatpush1.msra.mxu0 0.0
    %1935 = vmatprep.subr.mxu0 0.0
    %1936 = vmatpush1.msra.mxu0 0.0
    %1937 = vmatprep.subr.mxu0 0.0
    %1938 = vmatpush1.msra.mxu0 0.0
    %1939 = vmatprep.subr.mxu0 0.0
    %1940 = vmatpush1.msra.mxu0 0.0
    %1941 = vmatprep.subr.mxu0 0.0
    %1942 = vmatpush1.msra.mxu0 0.0
    %1943 = vmatprep.subr.mxu0 0.0
    %1944 = vmatpush1.msra.mxu0 0.0
    %1945 = vmatprep.subr.mxu0 0.0
    %1946 = vmatpush1.msra.mxu0 0.0
    %1947 = vmatprep.subr.mxu0 0.0
    %1948 = vmatpush1.msra.mxu0 0.0
    %1949 = vmatprep.subr.mxu0 0.0
    %1950 = vmatpush1.msra.mxu0 0.0
    %1951 = vmatprep.subr.mxu0 0.0
    %1952 = vmatpush1.msra.mxu0 0.0
    %1953 = vmatprep.subr.mxu0 0.0
    %1954 = vmatpush1.msra.mxu0 0.0
    %1955 = vmatprep.subr.mxu0 0.0
    %1956 = vmatpush1.msra.mxu0 0.0
    %1957 = vmatprep.subr.mxu0 0.0
    %1958 = vmatpush1.msra.mxu0 0.0
    %1959 = vmatprep.subr.mxu0 0.0
    %1960 = vmatpush1.msra.mxu0 0.0
    %1961 = vmatprep.subr.mxu0 0.0
    %1962 = vmatpush1.msra.mxu0 0.0
    %1963 = vmatprep.mubr.f32.mxu0 0.0
    %v1964 = vand.u32 %v1859, 4294901760
    %v1965 = vsub.f32 %v1859, %v1964
    %v1966 = vand.u32 %v1965, 4294901760
    %v1967 = vsub.f32 %v1965, %v1966
    %v1968 = vand.u32 %v1967, 4294901760
    %1969 = vmatmul.mubr.f32.gmra.mrb[0].mxu0 %v1968
    %v1970 = vpop.f32.mrb[0].mxu0
    %v1971 = vadd.f32 %v1881, %v1970
    %v1972 = vpop.f32.mrb[0].mxu0
    %1973 = vdwg.mxu0
    %1974 = vmatprep.subr.mxu0 0.0
    %v1975 = vand.u32 %v1860, 4294901760
    %v1976 = vsub.f32 %v1860, %v1975
    %v1977 = vand.u32 %v1976, 4294901760
    %v1978 = vsub.f32 %v1976, %v1977
    %v1979 = vand.u32 %v1978, 4294901760
    %1980 = vmatpush1.msra.mxu0 %v1979
    %1981 = vmatprep.subr.mxu0 0.0
    %v1982 = vand.u32 %v1861, 4294901760
    %v1983 = vsub.f32 %v1861, %v1982
    %v1984 = vand.u32 %v1983, 4294901760
    %v1985 = vsub.f32 %v1983, %v1984
    %v1986 = vand.u32 %v1985, 4294901760
    %1987 = vmatpush1.msra.mxu0 %v1986
    %1988 = vmatprep.subr.mxu0 0.0
    %v1989 = vand.u32 %v1862, 4294901760
    %v1990 = vsub.f32 %v1862, %v1989
    %v1991 = vand.u32 %v1990, 4294901760
    %v1992 = vsub.f32 %v1990, %v1991
    %v1993 = vand.u32 %v1992, 4294901760
    %1994 = vmatpush1.msra.mxu0 %v1993
    %1995 = vmatprep.subr.mxu0 0.0
    %v1996 = vand.u32 %v1863, 4294901760
    %v1997 = vsub.f32 %v1863, %v1996
    %v1998 = vand.u32 %v1997, 4294901760
    %v1999 = vsub.f32 %v1997, %v1998
    %v2000 = vand.u32 %v1999, 4294901760
    %2001 = vmatpush1.msra.mxu0 %v2000
    %2002 = vmatprep.subr.mxu0 0.0
    %v2003 = vand.u32 %v1864, 4294901760
    %v2004 = vsub.f32 %v1864, %v2003
    %v2005 = vand.u32 %v2004, 4294901760
    %v2006 = vsub.f32 %v2004, %v2005
    %v2007 = vand.u32 %v2006, 4294901760
    %2008 = vmatpush1.msra.mxu0 %v2007
    %2009 = vmatprep.subr.mxu0 0.0
    %v2010 = vand.u32 %v1865, 4294901760
    %v2011 = vsub.f32 %v1865, %v2010
    %v2012 = vand.u32 %v2011, 4294901760
    %v2013 = vsub.f32 %v2011, %v2012
    %v2014 = vand.u32 %v2013, 4294901760
    %2015 = vmatpush1.msra.mxu0 %v2014
    %2016 = vmatprep.subr.mxu0 0.0
    %v2017 = vand.u32 %v1866, 4294901760
    %v2018 = vsub.f32 %v1866, %v2017
    %v2019 = vand.u32 %v2018, 4294901760
    %v2020 = vsub.f32 %v2018, %v2019
    %v2021 = vand.u32 %v2020, 4294901760
    %2022 = vmatpush1.msra.mxu0 %v2021
    %2023 = vmatprep.subr.mxu0 0.0
    %v2024 = vand.u32 %v1867, 4294901760
    %v2025 = vsub.f32 %v1867, %v2024
    %v2026 = vand.u32 %v2025, 4294901760
    %v2027 = vsub.f32 %v2025, %v2026
    %v2028 = vand.u32 %v2027, 4294901760
    %2029 = vmatpush1.msra.mxu0 %v2028
    %2030 = vmatprep.subr.mxu0 0.0
    %v2031 = vand.u32 %v1868, 4294901760
    %v2032 = vsub.f32 %v1868, %v2031
    %v2033 = vand.u32 %v2032, 4294901760
    %v2034 = vsub.f32 %v2032, %v2033
    %v2035 = vand.u32 %v2034, 4294901760
    %2036 = vmatpush1.msra.mxu0 %v2035
    %2037 = vmatprep.subr.mxu0 0.0
    %v2038 = vand.u32 %v1869, 4294901760
    %v2039 = vsub.f32 %v1869, %v2038
    %v2040 = vand.u32 %v2039, 4294901760
    %v2041 = vsub.f32 %v2039, %v2040
    %v2042 = vand.u32 %v2041, 4294901760
    %2043 = vmatpush1.msra.mxu0 %v2042
    %2044 = vmatprep.subr.mxu0 0.0
    %v2045 = vand.u32 %v1870, 4294901760
    %v2046 = vsub.f32 %v1870, %v2045
    %v2047 = vand.u32 %v2046, 4294901760
    %v2048 = vsub.f32 %v2046, %v2047
    %v2049 = vand.u32 %v2048, 4294901760
    %2050 = vmatpush1.msra.mxu0 %v2049
    %2051 = vmatprep.subr.mxu0 0.0
    %v2052 = vand.u32 %v1871, 4294901760
    %v2053 = vsub.f32 %v1871, %v2052
    %v2054 = vand.u32 %v2053, 4294901760
    %v2055 = vsub.f32 %v2053, %v2054
    %v2056 = vand.u32 %v2055, 4294901760
    %2057 = vmatpush1.msra.mxu0 %v2056
    %2058 = vmatprep.subr.mxu0 0.0
    %v2059 = vand.u32 %v1872, 4294901760
    %v2060 = vsub.f32 %v1872, %v2059
    %v2061 = vand.u32 %v2060, 4294901760
    %v2062 = vsub.f32 %v2060, %v2061
    %v2063 = vand.u32 %v2062, 4294901760
    %2064 = vmatpush1.msra.mxu0 %v2063
    %2065 = vmatprep.subr.mxu0 0.0
    %v2066 = vand.u32 %v1873, 4294901760
    %v2067 = vsub.f32 %v1873, %v2066
    %v2068 = vand.u32 %v2067, 4294901760
    %v2069 = vsub.f32 %v2067, %v2068
    %v2070 = vand.u32 %v2069, 4294901760
    %2071 = vmatpush1.msra.mxu0 %v2070
    %2072 = vmatprep.subr.mxu0 0.0
    %v2073 = vand.u32 %v1874, 4294901760
    %v2074 = vsub.f32 %v1874, %v2073
    %v2075 = vand.u32 %v2074, 4294901760
    %v2076 = vsub.f32 %v2074, %v2075
    %v2077 = vand.u32 %v2076, 4294901760
    %2078 = vmatpush1.msra.mxu0 %v2077
    %2079 = vmatprep.subr.mxu0 0.0
    %v2080 = vand.u32 %v1875, 4294901760
    %v2081 = vsub.f32 %v1875, %v2080
    %v2082 = vand.u32 %v2081, 4294901760
    %v2083 = vsub.f32 %v2081, %v2082
    %v2084 = vand.u32 %v2083, 4294901760
    %2085 = vmatpush1.msra.mxu0 %v2084
    %2086 = vmatprep.subr.mxu0 0.0
    %2087 = vmatpush1.msra.mxu0 0.0
    %2088 = vmatprep.subr.mxu0 0.0
    %2089 = vmatpush1.msra.mxu0 0.0
    %2090 = vmatprep.subr.mxu0 0.0
    %2091 = vmatpush1.msra.mxu0 0.0
    %2092 = vmatprep.subr.mxu0 0.0
    %2093 = vmatpush1.msra.mxu0 0.0
    %2094 = vmatprep.subr.mxu0 0.0
    %2095 = vmatpush1.msra.mxu0 0.0
    %2096 = vmatprep.subr.mxu0 0.0
    %2097 = vmatpush1.msra.mxu0 0.0
    %2098 = vmatprep.subr.mxu0 0.0
    %2099 = vmatpush1.msra.mxu0 0.0
    %2100 = vmatprep.subr.mxu0 0.0
    %2101 = vmatpush1.msra.mxu0 0.0
    %2102 = vmatprep.subr.mxu0 0.0
    %2103 = vmatpush1.msra.mxu0 0.0
    %2104 = vmatprep.subr.mxu0 0.0
    %2105 = vmatpush1.msra.mxu0 0.0
    %2106 = vmatprep.subr.mxu0 0.0
    %2107 = vmatpush1.msra.mxu0 0.0
    %2108 = vmatprep.subr.mxu0 0.0
    %2109 = vmatpush1.msra.mxu0 0.0
    %2110 = vmatprep.subr.mxu0 0.0
    %2111 = vmatpush1.msra.mxu0 0.0
    %2112 = vmatprep.subr.mxu0 0.0
    %2113 = vmatpush1.msra.mxu0 0.0
    %2114 = vmatprep.subr.mxu0 0.0
    %2115 = vmatpush1.msra.mxu0 0.0
    %2116 = vmatprep.subr.mxu0 0.0
    %2117 = vmatpush1.msra.mxu0 0.0
    %2118 = vmatprep.mubr.f32.mxu0 0.0
    %v2119 = vand.u32 %v1859, 4294901760
    %2120 = vmatmul.mubr.f32.gmra.mrb[0].mxu0 %v2119
    %v2121 = vpop.f32.mrb[0].mxu0
    %v2122 = vadd.f32 %v1971, %v2121
    %v2123 = vpop.f32.mrb[0].mxu0
    %2124 = vdwg.mxu0
    %2125 = vmatprep.subr.mxu0 0.0
    %v2126 = vand.u32 %v1860, 4294901760
    %v2127 = vsub.f32 %v1860, %v2126
    %2128 = vmatpush1.msra.mxu0 %v2127
    %2129 = vmatprep.subr.mxu0 0.0
    %v2130 = vand.u32 %v1861, 4294901760
    %v2131 = vsub.f32 %v1861, %v2130
    %2132 = vmatpush1.msra.mxu0 %v2131
    %2133 = vmatprep.subr.mxu0 0.0
    %v2134 = vand.u32 %v1862, 4294901760
    %v2135 = vsub.f32 %v1862, %v2134
    %2136 = vmatpush1.msra.mxu0 %v2135
    %2137 = vmatprep.subr.mxu0 0.0
    %v2138 = vand.u32 %v1863, 4294901760
    %v2139 = vsub.f32 %v1863, %v2138
    %2140 = vmatpush1.msra.mxu0 %v2139
    %2141 = vmatprep.subr.mxu0 0.0
    %v2142 = vand.u32 %v1864, 4294901760
    %v2143 = vsub.f32 %v1864, %v2142
    %2144 = vmatpush1.msra.mxu0 %v2143
    %2145 = vmatprep.subr.mxu0 0.0
    %v2146 = vand.u32 %v1865, 4294901760
    %v2147 = vsub.f32 %v1865, %v2146
    %2148 = vmatpush1.msra.mxu0 %v2147
    %2149 = vmatprep.subr.mxu0 0.0
    %v2150 = vand.u32 %v1866, 4294901760
    %v2151 = vsub.f32 %v1866, %v2150
    %2152 = vmatpush1.msra.mxu0 %v2151
    %2153 = vmatprep.subr.mxu0 0.0
    %v2154 = vand.u32 %v1867, 4294901760
    %v2155 = vsub.f32 %v1867, %v2154
    %2156 = vmatpush1.msra.mxu0 %v2155
    %2157 = vmatprep.subr.mxu0 0.0
    %v2158 = vand.u32 %v1868, 4294901760
    %v2159 = vsub.f32 %v1868, %v2158
    %2160 = vmatpush1.msra.mxu0 %v2159
    %2161 = vmatprep.subr.mxu0 0.0
    %v2162 = vand.u32 %v1869, 4294901760
    %v2163 = vsub.f32 %v1869, %v2162
    %2164 = vmatpush1.msra.mxu0 %v2163
    %2165 = vmatprep.subr.mxu0 0.0
    %v2166 = vand.u32 %v1870, 4294901760
    %v2167 = vsub.f32 %v1870, %v2166
    %2168 = vmatpush1.msra.mxu0 %v2167
    %2169 = vmatprep.subr.mxu0 0.0
    %v2170 = vand.u32 %v1871, 4294901760
    %v2171 = vsub.f32 %v1871, %v2170
    %2172 = vmatpush1.msra.mxu0 %v2171
    %2173 = vmatprep.subr.mxu0 0.0
    %v2174 = vand.u32 %v1872, 4294901760
    %v2175 = vsub.f32 %v1872, %v2174
    %2176 = vmatpush1.msra.mxu0 %v2175
    %2177 = vmatprep.subr.mxu0 0.0
    %v2178 = vand.u32 %v1873, 4294901760
    %v2179 = vsub.f32 %v1873, %v2178
    %2180 = vmatpush1.msra.mxu0 %v2179
    %2181 = vmatprep.subr.mxu0 0.0
    %v2182 = vand.u32 %v1874, 4294901760
    %v2183 = vsub.f32 %v1874, %v2182
    %2184 = vmatpush1.msra.mxu0 %v2183
    %2185 = vmatprep.subr.mxu0 0.0
    %v2186 = vand.u32 %v1875, 4294901760
    %v2187 = vsub.f32 %v1875, %v2186
    %2188 = vmatpush1.msra.mxu0 %v2187
    %2189 = vmatprep.subr.mxu0 0.0
    %2190 = vmatpush1.msra.mxu0 0.0
    %2191 = vmatprep.subr.mxu0 0.0
    %2192 = vmatpush1.msra.mxu0 0.0
    %2193 = vmatprep.subr.mxu0 0.0
    %2194 = vmatpush1.msra.mxu0 0.0
    %2195 = vmatprep.subr.mxu0 0.0
    %2196 = vmatpush1.msra.mxu0 0.0
    %2197 = vmatprep.subr.mxu0 0.0
    %2198 = vmatpush1.msra.mxu0 0.0
    %2199 = vmatprep.subr.mxu0 0.0
    %2200 = vmatpush1.msra.mxu0 0.0
    %2201 = vmatprep.subr.mxu0 0.0
    %2202 = vmatpush1.msra.mxu0 0.0
    %2203 = vmatprep.subr.mxu0 0.0
    %2204 = vmatpush1.msra.mxu0 0.0
    %2205 = vmatprep.subr.mxu0 0.0
    %2206 = vmatpush1.msra.mxu0 0.0
    %2207 = vmatprep.subr.mxu0 0.0
    %2208 = vmatpush1.msra.mxu0 0.0
    %2209 = vmatprep.subr.mxu0 0.0
    %2210 = vmatpush1.msra.mxu0 0.0
    %2211 = vmatprep.subr.mxu0 0.0
    %2212 = vmatpush1.msra.mxu0 0.0
    %2213 = vmatprep.subr.mxu0 0.0
    %2214 = vmatpush1.msra.mxu0 0.0
    %2215 = vmatprep.subr.mxu0 0.0
    %2216 = vmatpush1.msra.mxu0 0.0
    %2217 = vmatprep.subr.mxu0 0.0
    %2218 = vmatpush1.msra.mxu0 0.0
    %2219 = vmatprep.subr.mxu0 0.0
    %2220 = vmatpush1.msra.mxu0 0.0
    %2221 = vmatprep.mubr.f32.mxu0 0.0
    %v2222 = vand.u32 %v1859, 4294901760
    %v2223 = vsub.f32 %v1859, %v2222
    %2224 = vmatmul.mubr.f32.gmra.mrb[0].mxu0 %v2223
    %v2225 = vpop.f32.mrb[0].mxu0
    %v2226 = vadd.f32 %v2122, %v2225
    %v2227 = vpop.f32.mrb[0].mxu0
    %2228 = vdwg.mxu0
    %2229 = vmatprep.subr.mxu0 0.0
    %v2230 = vand.u32 %v1860, 4294901760
    %2231 = vmatpush1.msra.mxu0 %v2230
    %2232 = vmatprep.subr.mxu0 0.0
    %v2233 = vand.u32 %v1861, 4294901760
    %2234 = vmatpush1.msra.mxu0 %v2233
    %2235 = vmatprep.subr.mxu0 0.0
    %v2236 = vand.u32 %v1862, 4294901760
    %2237 = vmatpush1.msra.mxu0 %v2236
    %2238 = vmatprep.subr.mxu0 0.0
    %v2239 = vand.u32 %v1863, 4294901760
    %2240 = vmatpush1.msra.mxu0 %v2239
    %2241 = vmatprep.subr.mxu0 0.0
    %v2242 = vand.u32 %v1864, 4294901760
    %2243 = vmatpush1.msra.mxu0 %v2242
    %2244 = vmatprep.subr.mxu0 0.0
    %v2245 = vand.u32 %v1865, 4294901760
    %2246 = vmatpush1.msra.mxu0 %v2245
    %2247 = vmatprep.subr.mxu0 0.0
    %v2248 = vand.u32 %v1866, 4294901760
    %2249 = vmatpush1.msra.mxu0 %v2248
    %2250 = vmatprep.subr.mxu0 0.0
    %v2251 = vand.u32 %v1867, 4294901760
    %2252 = vmatpush1.msra.mxu0 %v2251
    %2253 = vmatprep.subr.mxu0 0.0
    %v2254 = vand.u32 %v1868, 4294901760
    %2255 = vmatpush1.msra.mxu0 %v2254
    %2256 = vmatprep.subr.mxu0 0.0
    %v2257 = vand.u32 %v1869, 4294901760
    %2258 = vmatpush1.msra.mxu0 %v2257
    %2259 = vmatprep.subr.mxu0 0.0
    %v2260 = vand.u32 %v1870, 4294901760
    %2261 = vmatpush1.msra.mxu0 %v2260
    %2262 = vmatprep.subr.mxu0 0.0
    %v2263 = vand.u32 %v1871, 4294901760
    %2264 = vmatpush1.msra.mxu0 %v2263
    %2265 = vmatprep.subr.mxu0 0.0
    %v2266 = vand.u32 %v1872, 4294901760
    %2267 = vmatpush1.msra.mxu0 %v2266
    %2268 = vmatprep.subr.mxu0 0.0
    %v2269 = vand.u32 %v1873, 4294901760
    %2270 = vmatpush1.msra.mxu0 %v2269
    %2271 = vmatprep.subr.mxu0 0.0
    %v2272 = vand.u32 %v1874, 4294901760
    %2273 = vmatpush1.msra.mxu0 %v2272
    %2274 = vmatprep.subr.mxu0 0.0
    %v2275 = vand.u32 %v1875, 4294901760
    %2276 = vmatpush1.msra.mxu0 %v2275
    %2277 = vmatprep.subr.mxu0 0.0
    %2278 = vmatpush1.msra.mxu0 0.0
    %2279 = vmatprep.subr.mxu0 0.0
    %2280 = vmatpush1.msra.mxu0 0.0
    %2281 = vmatprep.subr.mxu0 0.0
    %2282 = vmatpush1.msra.mxu0 0.0
    %2283 = vmatprep.subr.mxu0 0.0
    %2284 = vmatpush1.msra.mxu0 0.0
    %2285 = vmatprep.subr.mxu0 0.0
    %2286 = vmatpush1.msra.mxu0 0.0
    %2287 = vmatprep.subr.mxu0 0.0
    %2288 = vmatpush1.msra.mxu0 0.0
    %2289 = vmatprep.subr.mxu0 0.0
    %2290 = vmatpush1.msra.mxu0 0.0
    %2291 = vmatprep.subr.mxu0 0.0
    %2292 = vmatpush1.msra.mxu0 0.0
    %2293 = vmatprep.subr.mxu0 0.0
    %2294 = vmatpush1.msra.mxu0 0.0
    %2295 = vmatprep.subr.mxu0 0.0
    %2296 = vmatpush1.msra.mxu0 0.0
    %2297 = vmatprep.subr.mxu0 0.0
    %2298 = vmatpush1.msra.mxu0 0.0
    %2299 = vmatprep.subr.mxu0 0.0
    %2300 = vmatpush1.msra.mxu0 0.0
    %2301 = vmatprep.subr.mxu0 0.0
    %2302 = vmatpush1.msra.mxu0 0.0
    %2303 = vmatprep.subr.mxu0 0.0
    %2304 = vmatpush1.msra.mxu0 0.0
    %2305 = vmatprep.subr.mxu0 0.0
    %2306 = vmatpush1.msra.mxu0 0.0
    %2307 = vmatprep.subr.mxu0 0.0
    %2308 = vmatpush1.msra.mxu0 0.0
    %2309 = vmatprep.mubr.f32.mxu0 0.0
    %v2310 = vand.u32 %v1859, 4294901760
    %v2311 = vsub.f32 %v1859, %v2310
    %v2312 = vand.u32 %v2311, 4294901760
    %2313 = vmatmul.mubr.f32.gmra.mrb[0].mxu0 %v2312
    %v2314 = vpop.f32.mrb[0].mxu0
    %v2315 = vadd.f32 %v2226, %v2314
    %v2316 = vpop.f32.mrb[0].mxu0
    %2317 = vdwg.mxu0
    %2318 = vmatprep.subr.mxu0 0.0
    %v2319 = vand.u32 %v1860, 4294901760
    %v2320 = vsub.f32 %v1860, %v2319
    %v2321 = vand.u32 %v2320, 4294901760
    %2322 = vmatpush1.msra.mxu0 %v2321
    %2323 = vmatprep.subr.mxu0 0.0
    %v2324 = vand.u32 %v1861, 4294901760
    %v2325 = vsub.f32 %v1861, %v2324
    %v2326 = vand.u32 %v2325, 4294901760
    %2327 = vmatpush1.msra.mxu0 %v2326
    %2328 = vmatprep.subr.mxu0 0.0
    %v2329 = vand.u32 %v1862, 4294901760
    %v2330 = vsub.f32 %v1862, %v2329
    %v2331 = vand.u32 %v2330, 4294901760
    %2332 = vmatpush1.msra.mxu0 %v2331
    %2333 = vmatprep.subr.mxu0 0.0
    %v2334 = vand.u32 %v1863, 4294901760
    %v2335 = vsub.f32 %v1863, %v2334
    %v2336 = vand.u32 %v2335, 4294901760
    %2337 = vmatpush1.msra.mxu0 %v2336
    %2338 = vmatprep.subr.mxu0 0.0
    %v2339 = vand.u32 %v1864, 4294901760
    %v2340 = vsub.f32 %v1864, %v2339
    %v2341 = vand.u32 %v2340, 4294901760
    %2342 = vmatpush1.msra.mxu0 %v2341
    %2343 = vmatprep.subr.mxu0 0.0
    %v2344 = vand.u32 %v1865, 4294901760
    %v2345 = vsub.f32 %v1865, %v2344
    %v2346 = vand.u32 %v2345, 4294901760
    %2347 = vmatpush1.msra.mxu0 %v2346
    %2348 = vmatprep.subr.mxu0 0.0
    %v2349 = vand.u32 %v1866, 4294901760
    %v2350 = vsub.f32 %v1866, %v2349
    %v2351 = vand.u32 %v2350, 4294901760
    %2352 = vmatpush1.msra.mxu0 %v2351
    %2353 = vmatprep.subr.mxu0 0.0
    %v2354 = vand.u32 %v1867, 4294901760
    %v2355 = vsub.f32 %v1867, %v2354
    %v2356 = vand.u32 %v2355, 4294901760
    %2357 = vmatpush1.msra.mxu0 %v2356
    %2358 = vmatprep.subr.mxu0 0.0
    %v2359 = vand.u32 %v1868, 4294901760
    %v2360 = vsub.f32 %v1868, %v2359
    %v2361 = vand.u32 %v2360, 4294901760
    %2362 = vmatpush1.msra.mxu0 %v2361
    %2363 = vmatprep.subr.mxu0 0.0
    %v2364 = vand.u32 %v1869, 4294901760
    %v2365 = vsub.f32 %v1869, %v2364
    %v2366 = vand.u32 %v2365, 4294901760
    %2367 = vmatpush1.msra.mxu0 %v2366
    %2368 = vmatprep.subr.mxu0 0.0
    %v2369 = vand.u32 %v1870, 4294901760
    %v2370 = vsub.f32 %v1870, %v2369
    %v2371 = vand.u32 %v2370, 4294901760
    %2372 = vmatpush1.msra.mxu0 %v2371
    %2373 = vmatprep.subr.mxu0 0.0
    %v2374 = vand.u32 %v1871, 4294901760
    %v2375 = vsub.f32 %v1871, %v2374
    %v2376 = vand.u32 %v2375, 4294901760
    %2377 = vmatpush1.msra.mxu0 %v2376
    %2378 = vmatprep.subr.mxu0 0.0
    %v2379 = vand.u32 %v1872, 4294901760
    %v2380 = vsub.f32 %v1872, %v2379
    %v2381 = vand.u32 %v2380, 4294901760
    %2382 = vmatpush1.msra.mxu0 %v2381
    %2383 = vmatprep.subr.mxu0 0.0
    %v2384 = vand.u32 %v1873, 4294901760
    %v2385 = vsub.f32 %v1873, %v2384
    %v2386 = vand.u32 %v2385, 4294901760
    %2387 = vmatpush1.msra.mxu0 %v2386
    %2388 = vmatprep.subr.mxu0 0.0
    %v2389 = vand.u32 %v1874, 4294901760
    %v2390 = vsub.f32 %v1874, %v2389
    %v2391 = vand.u32 %v2390, 4294901760
    %2392 = vmatpush1.msra.mxu0 %v2391
    %2393 = vmatprep.subr.mxu0 0.0
    %v2394 = vand.u32 %v1875, 4294901760
    %v2395 = vsub.f32 %v1875, %v2394
    %v2396 = vand.u32 %v2395, 4294901760
    %2397 = vmatpush1.msra.mxu0 %v2396
    %2398 = vmatprep.subr.mxu0 0.0
    %2399 = vmatpush1.msra.mxu0 0.0
    %2400 = vmatprep.subr.mxu0 0.0
    %2401 = vmatpush1.msra.mxu0 0.0
    %2402 = vmatprep.subr.mxu0 0.0
    %2403 = vmatpush1.msra.mxu0 0.0
    %2404 = vmatprep.subr.mxu0 0.0
    %2405 = vmatpush1.msra.mxu0 0.0
    %2406 = vmatprep.subr.mxu0 0.0
    %2407 = vmatpush1.msra.mxu0 0.0
    %2408 = vmatprep.subr.mxu0 0.0
    %2409 = vmatpush1.msra.mxu0 0.0
    %2410 = vmatprep.subr.mxu0 0.0
    %2411 = vmatpush1.msra.mxu0 0.0
    %2412 = vmatprep.subr.mxu0 0.0
    %2413 = vmatpush1.msra.mxu0 0.0
    %2414 = vmatprep.subr.mxu0 0.0
    %2415 = vmatpush1.msra.mxu0 0.0
    %2416 = vmatprep.subr.mxu0 0.0
    %2417 = vmatpush1.msra.mxu0 0.0
    %2418 = vmatprep.subr.mxu0 0.0
    %2419 = vmatpush1.msra.mxu0 0.0
    %2420 = vmatprep.subr.mxu0 0.0
    %2421 = vmatpush1.msra.mxu0 0.0
    %2422 = vmatprep.subr.mxu0 0.0
    %2423 = vmatpush1.msra.mxu0 0.0
    %2424 = vmatprep.subr.mxu0 0.0
    %2425 = vmatpush1.msra.mxu0 0.0
    %2426 = vmatprep.subr.mxu0 0.0
    %2427 = vmatpush1.msra.mxu0 0.0
    %2428 = vmatprep.subr.mxu0 0.0
    %2429 = vmatpush1.msra.mxu0 0.0
    %2430 = vmatprep.mubr.f32.mxu0 0.0
    %v2431 = vand.u32 %v1859, 4294901760
    %2432 = vmatmul.mubr.f32.gmra.mrb[0].mxu0 %v2431
    %v2433 = vpop.f32.mrb[0].mxu0
    %v2434 = vadd.f32 %v2315, %v2433
    %v2435 = vpop.f32.mrb[0].mxu0
    %2436 = vdwg.mxu0
    %2437 = vmatprep.subr.mxu0 0.0
    %v2438 = vand.u32 %v1860, 4294901760
    %2439 = vmatpush1.msra.mxu0 %v2438
    %2440 = vmatprep.subr.mxu0 0.0
    %v2441 = vand.u32 %v1861, 4294901760
    %2442 = vmatpush1.msra.mxu0 %v2441
    %2443 = vmatprep.subr.mxu0 0.0
    %v2444 = vand.u32 %v1862, 4294901760
    %2445 = vmatpush1.msra.mxu0 %v2444
    %2446 = vmatprep.subr.mxu0 0.0
    %v2447 = vand.u32 %v1863, 4294901760
    %2448 = vmatpush1.msra.mxu0 %v2447
    %2449 = vmatprep.subr.mxu0 0.0
    %v2450 = vand.u32 %v1864, 4294901760
    %2451 = vmatpush1.msra.mxu0 %v2450
    %2452 = vmatprep.subr.mxu0 0.0
    %v2453 = vand.u32 %v1865, 4294901760
    %2454 = vmatpush1.msra.mxu0 %v2453
    %2455 = vmatprep.subr.mxu0 0.0
    %v2456 = vand.u32 %v1866, 4294901760
    %2457 = vmatpush1.msra.mxu0 %v2456
    %2458 = vmatprep.subr.mxu0 0.0
    %v2459 = vand.u32 %v1867, 4294901760
    %2460 = vmatpush1.msra.mxu0 %v2459
    %2461 = vmatprep.subr.mxu0 0.0
    %v2462 = vand.u32 %v1868, 4294901760
    %2463 = vmatpush1.msra.mxu0 %v2462
    %2464 = vmatprep.subr.mxu0 0.0
    %v2465 = vand.u32 %v1869, 4294901760
    %2466 = vmatpush1.msra.mxu0 %v2465
    %2467 = vmatprep.subr.mxu0 0.0
    %v2468 = vand.u32 %v1870, 4294901760
    %2469 = vmatpush1.msra.mxu0 %v2468
    %2470 = vmatprep.subr.mxu0 0.0
    %v2471 = vand.u32 %v1871, 4294901760
    %2472 = vmatpush1.msra.mxu0 %v2471
    %2473 = vmatprep.subr.mxu0 0.0
    %v2474 = vand.u32 %v1872, 4294901760
    %2475 = vmatpush1.msra.mxu0 %v2474
    %2476 = vmatprep.subr.mxu0 0.0
    %v2477 = vand.u32 %v1873, 4294901760
    %2478 = vmatpush1.msra.mxu0 %v2477
    %2479 = vmatprep.subr.mxu0 0.0
    %v2480 = vand.u32 %v1874, 4294901760
    %2481 = vmatpush1.msra.mxu0 %v2480
    %2482 = vmatprep.subr.mxu0 0.0
    %v2483 = vand.u32 %v1875, 4294901760
    %2484 = vmatpush1.msra.mxu0 %v2483
    %2485 = vmatprep.subr.mxu0 0.0
    %2486 = vmatpush1.msra.mxu0 0.0
    %2487 = vmatprep.subr.mxu0 0.0
    %2488 = vmatpush1.msra.mxu0 0.0
    %2489 = vmatprep.subr.mxu0 0.0
    %2490 = vmatpush1.msra.mxu0 0.0
    %2491 = vmatprep.subr.mxu0 0.0
    %2492 = vmatpush1.msra.mxu0 0.0
    %2493 = vmatprep.subr.mxu0 0.0
    %2494 = vmatpush1.msra.mxu0 0.0
    %2495 = vmatprep.subr.mxu0 0.0
    %2496 = vmatpush1.msra.mxu0 0.0
    %2497 = vmatprep.subr.mxu0 0.0
    %2498 = vmatpush1.msra.mxu0 0.0
    %2499 = vmatprep.subr.mxu0 0.0
    %2500 = vmatpush1.msra.mxu0 0.0
    %2501 = vmatprep.subr.mxu0 0.0
    %2502 = vmatpush1.msra.mxu0 0.0
    %2503 = vmatprep.subr.mxu0 0.0
    %2504 = vmatpush1.msra.mxu0 0.0
    %2505 = vmatprep.subr.mxu0 0.0
    %2506 = vmatpush1.msra.mxu0 0.0
    %2507 = vmatprep.subr.mxu0 0.0
    %2508 = vmatpush1.msra.mxu0 0.0
    %2509 = vmatprep.subr.mxu0 0.0
    %2510 = vmatpush1.msra.mxu0 0.0
    %2511 = vmatprep.subr.mxu0 0.0
    %2512 = vmatpush1.msra.mxu0 0.0
    %2513 = vmatprep.subr.mxu0 0.0
    %2514 = vmatpush1.msra.mxu0 0.0
    %2515 = vmatprep.subr.mxu0 0.0
    %2516 = vmatpush1.msra.mxu0 0.0
    %2517 = vmatprep.mubr.f32.mxu0 0.0
    %v2518 = vand.u32 %v1859, 4294901760
    %2519 = vmatmul.mubr.f32.gmra.mrb[0].mxu0 %v2518
    %v2520 = vpop.f32.mrb[0].mxu0
    %v2521 = vadd.f32 %v2434, %v2520
    %v2522 = vpop.f32.mrb[0].mxu0
    %2523 = vdwg.mxu0
    %2524 = vst [vmem:[#allocation8] sm:$0xff] %v2521
    // Predicated region
    $region34: #{tpu_custom_call.1} parent=1 // pred_check
      _
    $region35: #{tpu_custom_call.1} parent=1 // pred_check_branch
      %2526 = sbr.rel (0) target = $region37
    $region36: #{tpu_custom_call.1} parent=1 // pred_region
      %s2528 = ssub.s32 128, 128
      %2529 = vsyncadd [#allocation4], %s2528
      %s2531 = sshll.u32 [#allocation8], 4
      %s2532 = int_to_ptr.vmem [resolvable:$true] %s2531
      %2534 = dma.vmem_to_hbm [thread:$0]  %s2532, 128, %s5, [#allocation4]
    $region37: #{tpu_custom_call.1} parent=1 // pred_fallthru
      _
    // Predicated region
    $region38: #{tpu_custom_call.1} parent=1 // pred_check
      _
    $region39: #{tpu_custom_call.1} parent=1 // pred_check_branch
      %2536 = sbr.rel (0) target = $region41
    $region40: #{tpu_custom_call.1} parent=1 // pred_region
      %2537 = dma.done [#allocation4], 128
    $region41: #{tpu_custom_call.1} parent=1 // pred_fallthru
      _
    %2538 = vsyncpa [#allocation3], 1
    %2539 = vsyncpa [#allocation6], 1
    %2540 = vsyncpa [#allocation4], 1

</llo_original>
